<compile_context>
chip_gen: v7x
topology: tpu7x:2x2x1
jax: 0.10.0
libtpu: 0.0.40
codegen_flags: <defaults>
</compile_context>

<pallas_src>
import functools
import math

import jax
import jax.numpy as jnp
from jax.experimental import pallas as pl
from jax.experimental.pallas import tpu as pltpu


# ------------------------------ shared math ------------------------------

def _gelu_tanh(x):
    c = math.sqrt(2.0 / math.pi)
    return 0.5 * x * (1.0 + jnp.tanh(c * (x + 0.044715 * x * x * x)))


def _sigmoid(x):
    return 1.0 / (1.0 + jnp.exp(-x))


def _group_norm1(v, gamma, beta, eps):
    # GroupNorm(num_groups=1): stats over the whole (C, T) tile of one sample.
    mean = jnp.mean(v)
    var = jnp.mean((v - mean) ** 2)
    vhat = (v - mean) * jax.lax.rsqrt(var + eps)
    return vhat * gamma + beta


# ------------------------------ Pallas kernel ------------------------------

def _dconv_layer_kernel(xpad_ref, w1_ref, b1_ref, g1_ref, be1_ref,
                        w2_ref, b2_ref, g2_ref, be2_ref, ls_ref, out_ref,
                        *, kernel, dilation, pad, eps):
    channels, T = out_ref.shape

    # Dilated conv as one MXU matmul: concat K shifted (C, T) views -> (K*C, T).
    taps = [xpad_ref[:, k * dilation: k * dilation + T] for k in range(kernel)]
    x_win = jnp.concatenate(taps, axis=0)                                   # (K*C, T)
    h = jnp.dot(w1_ref[...], x_win, preferred_element_type=jnp.float32)
    h = h + b1_ref[...]                                                     # (H, T)

    # GroupNorm(1, H) + GELU (tanh approx).
    h = _group_norm1(h, g1_ref[...], be1_ref[...], eps)
    h = _gelu_tanh(h)

    # 1x1 conv to 2*C channels (MXU), then GroupNorm(1, 2C).
    y = jnp.dot(w2_ref[...], h, preferred_element_type=jnp.float32)
    y = y + b2_ref[...]                                                     # (2C, T)
    y = _group_norm1(y, g2_ref[...], be2_ref[...], eps)

    # GLU over the channel dim, LayerScale, residual add.
    a = y[:channels, :]
    g = y[channels:, :]
    z = a * _sigmoid(g)
    skip = xpad_ref[:, pad: pad + T]
    out_ref[...] = skip + ls_ref[...] * z


# ------------------------------ wrappers ------------------------------

def dconv_layer_forward(x, p, *, kernel, dilation):
    """One fused DConv residual layer: returns skip + branch(x)."""
    B, C, T = x.shape
    H = p["w1"].shape[0]
    pad = dilation * (kernel // 2)
    Tp = T + 2 * pad
    xpad = jnp.pad(x, ((0, 0), (0, 0), (pad, pad)))

    # torch Conv1d weight (O, I, K) -> (O, K*C) matching the tap-concat order.
    w1_mat = jnp.transpose(p["w1"], (0, 2, 1)).reshape(H, kernel * C)
    w2_mat = p["w2"].reshape(2 * C, H)

    col = lambda v: v.reshape(-1, 1).astype(jnp.float32)
    b1, g1, be1 = col(p["b1"]), col(p["gn1_w"]), col(p["gn1_b"])
    b2, g2, be2 = col(p["b2"]), col(p["gn2_w"]), col(p["gn2_b"])
    ls = col(p["ls"])

    flops = int(2 * B * T * (H * kernel * C + 2 * C * H))
    transc = int(B * T * (2 * H + C))
    bytes_acc = int(4 * (xpad.size + B * C * T + w1_mat.size + w2_mat.size))
    cost = pl.CostEstimate(flops=flops, transcendentals=transc,
                           bytes_accessed=bytes_acc)

    kernel_fn = functools.partial(_dconv_layer_kernel, kernel=kernel,
                                  dilation=dilation, pad=pad, eps=1e-5)

    def full(shape):
        return pl.BlockSpec(shape, lambda b, _s=shape: (0,) * len(_s))

    return pl.pallas_call(
        kernel_fn,
        out_shape=jax.ShapeDtypeStruct((B, C, T), jnp.float32),
        grid_spec=pltpu.PrefetchScalarGridSpec(
            num_scalar_prefetch=0,
            grid=(B,),
            in_specs=[
                pl.BlockSpec((None, C, Tp), lambda b: (b, 0, 0)),   # padded input
                full((H, kernel * C)),                              # conv1 weight
                full((H, 1)), full((H, 1)), full((H, 1)),           # b1, gn1 w/b
                full((2 * C, H)),                                   # conv2 weight
                full((2 * C, 1)), full((2 * C, 1)), full((2 * C, 1)),  # b2, gn2 w/b
                full((C, 1)),                                       # layer scale
            ],
            out_specs=pl.BlockSpec((None, C, T), lambda b: (b, 0, 0)),
        ),
        compiler_params=pltpu.CompilerParams(
            dimension_semantics=("parallel",)),
        cost_estimate=cost,
    )(xpad, w1_mat, b1, g1, be1, w2_mat, b2, g2, be2, ls)


def dconv_forward(x, layer_params, *, kernel=3, dilate=True):
    for d, p in enumerate(layer_params):
        dilation = 2 ** d if dilate else 1
        x = dconv_layer_forward(x, p, kernel=kernel, dilation=dilation)
    return x


# ------------------------------ init + reference ------------------------------

def init_dconv_params(key, channels, compress=4, depth=2, kernel=3, init=1e-4):
    hidden = int(channels / compress)
    params = []
    for _ in range(depth):
        key, *ks = jax.random.split(key, 9)
        params.append({
            "w1": 0.2 * jax.random.normal(ks[0], (hidden, channels, kernel), jnp.float32),
            "b1": 0.1 * jax.random.normal(ks[1], (hidden,), jnp.float32),
            "gn1_w": 1.0 + 0.1 * jax.random.normal(ks[2], (hidden,), jnp.float32),
            "gn1_b": 0.1 * jax.random.normal(ks[3], (hidden,), jnp.float32),
            "w2": 0.2 * jax.random.normal(ks[4], (2 * channels, hidden, 1), jnp.float32),
            "b2": 0.1 * jax.random.normal(ks[5], (2 * channels,), jnp.float32),
            "gn2_w": 1.0 + 0.1 * jax.random.normal(ks[6], (2 * channels,), jnp.float32),
            "gn2_b": 0.1 * jax.random.normal(ks[7], (2 * channels,), jnp.float32),
            "ls": jnp.full((channels,), init, jnp.float32),
        })
    return params


def dconv_reference(x, layer_params, *, kernel=3, dilate=True, eps=1e-5):
    def gn1(v, w, b):
        mean = jnp.mean(v, axis=(1, 2), keepdims=True)
        var = jnp.mean((v - mean) ** 2, axis=(1, 2), keepdims=True)
        return (v - mean) / jnp.sqrt(var + eps) * w[None, :, None] + b[None, :, None]

    for d, p in enumerate(layer_params):
        dilation = 2 ** d if dilate else 1
        pad = dilation * (kernel // 2)
        C = x.shape[1]
        skip = x
        h = jax.lax.conv_general_dilated(
            x, p["w1"], window_strides=(1,), padding=[(pad, pad)],
            rhs_dilation=(dilation,), dimension_numbers=("NCH", "OIH", "NCH"))
        h = h + p["b1"][None, :, None]
        h = gn1(h, p["gn1_w"], p["gn1_b"])
        h = _gelu_tanh(h)
        y = jnp.einsum("oi,bit->bot", p["w2"][:, :, 0], h) + p["b2"][None, :, None]
        y = gn1(y, p["gn2_w"], p["gn2_b"])
        a, g = y[:, :C], y[:, C:]
        z = a * _sigmoid(g)
        x = skip + p["ls"][None, :, None] * z
    return x


# ------------------------------ demo ------------------------------

if __name__ == "__main__":
    key = jax.random.PRNGKey(0)
    k_p, k_x = jax.random.split(key)

    B, C, T = 2, 32, 128          # T multiple of 128 -> lane-dense stores
    compress, depth, kernel = 4, 2, 3

    params = init_dconv_params(k_p, C, compress=compress, depth=depth,
                               kernel=kernel, init=0.5)
    x = jax.random.normal(k_x, (B, C, T), jnp.float32)

    fwd = jax.jit(functools.partial(dconv_forward, kernel=kernel))
    out = jax.block_until_ready(fwd(x, params))

    ref = dconv_reference(x, params, kernel=kernel)
    assert out.shape == (B, C, T)
    err = float(jnp.max(jnp.abs(out - ref)))
    assert err < 2e-3, f"max abs err {err}"

    print("KERNEL_OK")
</pallas_src>

<mosaic_0001>
module attributes {stable_mosaic.version = 11 : i64} {
  func.func @_dconv_layer_kernel(%arg0: i32, %arg1: memref<1x32x130xf32, #tpu.memory_space<vmem>>, %arg2: memref<8x96xf32, #tpu.memory_space<vmem>>, %arg3: memref<8x1xf32, #tpu.memory_space<vmem>>, %arg4: memref<8x1xf32, #tpu.memory_space<vmem>>, %arg5: memref<8x1xf32, #tpu.memory_space<vmem>>, %arg6: memref<64x8xf32, #tpu.memory_space<vmem>>, %arg7: memref<64x1xf32, #tpu.memory_space<vmem>>, %arg8: memref<64x1xf32, #tpu.memory_space<vmem>>, %arg9: memref<64x1xf32, #tpu.memory_space<vmem>>, %arg10: memref<32x1xf32, #tpu.memory_space<vmem>>, %arg11: memref<1x32x128xf32, #tpu.memory_space<vmem>>) attributes {dimension_semantics = [#tpu.dimension_semantics<parallel>], iteration_bounds = array<i64: 2>, scalar_prefetch = 0 : i64, scratch_operands = 0 : i64, tpu.core_type = #tpu.core_type<tc>, window_params = [{transform_indices = @transform_0, window_bounds = array<i64: 1, 32, 130>}, {pipeline_mode = #tpu.pipeline_mode<synchronous>, transform_indices = @transform_1, window_bounds = array<i64: 8, 96>}, {pipeline_mode = #tpu.pipeline_mode<synchronous>, transform_indices = @transform_2, window_bounds = array<i64: 8, 1>}, {pipeline_mode = #tpu.pipeline_mode<synchronous>, transform_indices = @transform_3, window_bounds = array<i64: 8, 1>}, {pipeline_mode = #tpu.pipeline_mode<synchronous>, transform_indices = @transform_4, window_bounds = array<i64: 8, 1>}, {pipeline_mode = #tpu.pipeline_mode<synchronous>, transform_indices = @transform_5, window_bounds = array<i64: 64, 8>}, {pipeline_mode = #tpu.pipeline_mode<synchronous>, transform_indices = @transform_6, window_bounds = array<i64: 64, 1>}, {pipeline_mode = #tpu.pipeline_mode<synchronous>, transform_indices = @transform_7, window_bounds = array<i64: 64, 1>}, {pipeline_mode = #tpu.pipeline_mode<synchronous>, transform_indices = @transform_8, window_bounds = array<i64: 64, 1>}, {pipeline_mode = #tpu.pipeline_mode<synchronous>, transform_indices = @transform_9, window_bounds = array<i64: 32, 1>}, {transform_indices = @transform_10, window_bounds = array<i64: 1, 32, 128>}]} {
    %c0 = arith.constant 0 : index
    %c0_0 = arith.constant 0 : index
    %c0_1 = arith.constant 0 : index
    %0 = vector.load %arg1[%c0, %c0_0, %c0_1] : memref<1x32x130xf32, #tpu.memory_space<vmem>>, vector<1x32x128xf32>
    %1 = vector.shape_cast %0 : vector<1x32x128xf32> to vector<32x128xf32>
    %c0_2 = arith.constant 0 : index
    %c0_3 = arith.constant 0 : index
    %c1 = arith.constant 1 : index
    %2 = vector.load %arg1[%c0_2, %c0_3, %c1] : memref<1x32x130xf32, #tpu.memory_space<vmem>>, vector<1x32x128xf32>
    %3 = vector.shape_cast %2 : vector<1x32x128xf32> to vector<32x128xf32>
    %c0_4 = arith.constant 0 : index
    %c0_5 = arith.constant 0 : index
    %c2 = arith.constant 2 : index
    %4 = vector.load %arg1[%c0_4, %c0_5, %c2] : memref<1x32x130xf32, #tpu.memory_space<vmem>>, vector<1x32x128xf32>
    %5 = vector.shape_cast %4 : vector<1x32x128xf32> to vector<32x128xf32>
    %6 = tpu.concatenate %1, %3, %5 in 0 : vector<32x128xf32>, vector<32x128xf32>, vector<32x128xf32> -> vector<96x128xf32>
    %c0_6 = arith.constant 0 : index
    %c0_7 = arith.constant 0 : index
    %7 = vector.load %arg2[%c0_6, %c0_7] : memref<8x96xf32, #tpu.memory_space<vmem>>, vector<8x96xf32>
    %cst = arith.constant dense<0.000000e+00> : vector<8x128xf32>
    %8 = tpu.matmul %7, %6, %cst {dimension_numbers = #tpu.dot_dimension_numbers<[1], [0], [0], [1], [0, 0, 1, 1], [], []>} : vector<8x96xf32>, vector<96x128xf32>, vector<8x128xf32> -> vector<8x128xf32>
    %c0_8 = arith.constant 0 : index
    %c0_9 = arith.constant 0 : index
    %9 = vector.load %arg3[%c0_8, %c0_9] : memref<8x1xf32, #tpu.memory_space<vmem>>, vector<8x1xf32>
    %10 = vector.broadcast %9 : vector<8x1xf32> to vector<8x128xf32>
    %11 = arith.addf %8, %10 : vector<8x128xf32>
    %c0_10 = arith.constant 0 : index
    %c0_11 = arith.constant 0 : index
    %12 = vector.load %arg4[%c0_10, %c0_11] : memref<8x1xf32, #tpu.memory_space<vmem>>, vector<8x1xf32>
    %c0_12 = arith.constant 0 : index
    %c0_13 = arith.constant 0 : index
    %13 = vector.load %arg5[%c0_12, %c0_13] : memref<8x1xf32, #tpu.memory_space<vmem>>, vector<8x1xf32>
    %14 = vector.shape_cast %11 : vector<8x128xf32> to vector<1x8x128xf32>
    %cst_14 = arith.constant dense<0.000000e+00> : vector<1xf32>
    %15 = vector.multi_reduction <add>, %14, %cst_14 [1, 2] : vector<1x8x128xf32> to vector<1xf32>
    %16 = vector.shape_cast %15 : vector<1xf32> to vector<1x1x1xf32>
    %17 = vector.extract %16[0, 0, 0] : f32 from vector<1x1x1xf32>
    %cst_15 = arith.constant 1.024000e+03 : f32
    %18 = arith.divf %17, %cst_15 : f32
    %19 = vector.broadcast %18 : f32 to vector<8x128xf32>
    %20 = arith.subf %11, %19 : vector<8x128xf32>
    %21 = arith.mulf %20, %20 : vector<8x128xf32>
    %22 = vector.shape_cast %21 : vector<8x128xf32> to vector<1x8x128xf32>
    %cst_16 = arith.constant dense<0.000000e+00> : vector<1xf32>
    %23 = vector.multi_reduction <add>, %22, %cst_16 [1, 2] : vector<1x8x128xf32> to vector<1xf32>
    %24 = vector.shape_cast %23 : vector<1xf32> to vector<1x1x1xf32>
    %25 = vector.extract %24[0, 0, 0] : f32 from vector<1x1x1xf32>
    %cst_17 = arith.constant 1.024000e+03 : f32
    %26 = arith.divf %25, %cst_17 : f32
    %27 = vector.broadcast %18 : f32 to vector<8x128xf32>
    %28 = arith.subf %11, %27 : vector<8x128xf32>
    %cst_18 = arith.constant 9.99999974E-6 : f32
    %29 = arith.addf %26, %cst_18 : f32
    %30 = math.rsqrt %29 : f32
    %31 = vector.broadcast %30 : f32 to vector<8x128xf32>
    %32 = arith.mulf %28, %31 : vector<8x128xf32>
    %33 = vector.broadcast %12 : vector<8x1xf32> to vector<8x128xf32>
    %34 = arith.mulf %32, %33 : vector<8x128xf32>
    %35 = vector.broadcast %13 : vector<8x1xf32> to vector<8x128xf32>
    %36 = arith.addf %34, %35 : vector<8x128xf32>
    %cst_19 = arith.constant 5.000000e-01 : f32
    %37 = vector.broadcast %cst_19 : f32 to vector<8x128xf32>
    %38 = arith.mulf %37, %36 : vector<8x128xf32>
    %cst_20 = arith.constant 4.471500e-02 : f32
    %39 = vector.broadcast %cst_20 : f32 to vector<8x128xf32>
    %40 = arith.mulf %39, %36 : vector<8x128xf32>
    %41 = arith.mulf %40, %36 : vector<8x128xf32>
    %42 = arith.mulf %41, %36 : vector<8x128xf32>
    %43 = arith.addf %36, %42 : vector<8x128xf32>
    %cst_21 = arith.constant 0.797884583 : f32
    %44 = vector.broadcast %cst_21 : f32 to vector<8x128xf32>
    %45 = arith.mulf %44, %43 : vector<8x128xf32>
    %46 = math.tanh %45 : vector<8x128xf32>
    %cst_22 = arith.constant 1.000000e+00 : f32
    %47 = vector.broadcast %cst_22 : f32 to vector<8x128xf32>
    %48 = arith.addf %47, %46 : vector<8x128xf32>
    %49 = arith.mulf %38, %48 : vector<8x128xf32>
    %c0_23 = arith.constant 0 : index
    %c0_24 = arith.constant 0 : index
    %50 = vector.load %arg6[%c0_23, %c0_24] : memref<64x8xf32, #tpu.memory_space<vmem>>, vector<64x8xf32>
    %cst_25 = arith.constant dense<0.000000e+00> : vector<64x128xf32>
    %51 = tpu.matmul %50, %49, %cst_25 {dimension_numbers = #tpu.dot_dimension_numbers<[1], [0], [0], [1], [0, 0, 1, 1], [], []>} : vector<64x8xf32>, vector<8x128xf32>, vector<64x128xf32> -> vector<64x128xf32>
    %c0_26 = arith.constant 0 : index
    %c0_27 = arith.constant 0 : index
    %52 = vector.load %arg7[%c0_26, %c0_27] : memref<64x1xf32, #tpu.memory_space<vmem>>, vector<64x1xf32>
    %53 = vector.broadcast %52 : vector<64x1xf32> to vector<64x128xf32>
    %54 = arith.addf %51, %53 : vector<64x128xf32>
    %c0_28 = arith.constant 0 : index
    %c0_29 = arith.constant 0 : index
    %55 = vector.load %arg8[%c0_28, %c0_29] : memref<64x1xf32, #tpu.memory_space<vmem>>, vector<64x1xf32>
    %c0_30 = arith.constant 0 : index
    %c0_31 = arith.constant 0 : index
    %56 = vector.load %arg9[%c0_30, %c0_31] : memref<64x1xf32, #tpu.memory_space<vmem>>, vector<64x1xf32>
    %57 = vector.shape_cast %54 : vector<64x128xf32> to vector<1x64x128xf32>
    %cst_32 = arith.constant dense<0.000000e+00> : vector<1xf32>
    %58 = vector.multi_reduction <add>, %57, %cst_32 [1, 2] : vector<1x64x128xf32> to vector<1xf32>
    %59 = vector.shape_cast %58 : vector<1xf32> to vector<1x1x1xf32>
    %60 = vector.extract %59[0, 0, 0] : f32 from vector<1x1x1xf32>
    %cst_33 = arith.constant 8.192000e+03 : f32
    %61 = arith.divf %60, %cst_33 : f32
    %62 = vector.broadcast %61 : f32 to vector<64x128xf32>
    %63 = arith.subf %54, %62 : vector<64x128xf32>
    %64 = arith.mulf %63, %63 : vector<64x128xf32>
    %65 = vector.shape_cast %64 : vector<64x128xf32> to vector<1x64x128xf32>
    %cst_34 = arith.constant dense<0.000000e+00> : vector<1xf32>
    %66 = vector.multi_reduction <add>, %65, %cst_34 [1, 2] : vector<1x64x128xf32> to vector<1xf32>
    %67 = vector.shape_cast %66 : vector<1xf32> to vector<1x1x1xf32>
    %68 = vector.extract %67[0, 0, 0] : f32 from vector<1x1x1xf32>
    %cst_35 = arith.constant 8.192000e+03 : f32
    %69 = arith.divf %68, %cst_35 : f32
    %70 = vector.broadcast %61 : f32 to vector<64x128xf32>
    %71 = arith.subf %54, %70 : vector<64x128xf32>
    %cst_36 = arith.constant 9.99999974E-6 : f32
    %72 = arith.addf %69, %cst_36 : f32
    %73 = math.rsqrt %72 : f32
    %74 = vector.broadcast %73 : f32 to vector<64x128xf32>
    %75 = arith.mulf %71, %74 : vector<64x128xf32>
    %76 = vector.broadcast %55 : vector<64x1xf32> to vector<64x128xf32>
    %77 = arith.mulf %75, %76 : vector<64x128xf32>
    %78 = vector.broadcast %56 : vector<64x1xf32> to vector<64x128xf32>
    %79 = arith.addf %77, %78 : vector<64x128xf32>
    %80 = vector.extract_strided_slice %79 {offsets = [0, 0], sizes = [32, 128], strides = [1, 1]} : vector<64x128xf32> to vector<32x128xf32>
    %81 = vector.extract_strided_slice %79 {offsets = [32, 0], sizes = [32, 128], strides = [1, 1]} : vector<64x128xf32> to vector<32x128xf32>
    %cst_37 = arith.constant 0.000000e+00 : f32
    %82 = vector.broadcast %cst_37 : f32 to vector<32x128xf32>
    %83 = arith.subf %82, %81 : vector<32x128xf32>
    %84 = math.exp %83 : vector<32x128xf32>
    %cst_38 = arith.constant 1.000000e+00 : f32
    %85 = vector.broadcast %cst_38 : f32 to vector<32x128xf32>
    %86 = arith.addf %85, %84 : vector<32x128xf32>
    %cst_39 = arith.constant 1.000000e+00 : f32
    %87 = vector.broadcast %cst_39 : f32 to vector<32x128xf32>
    %88 = arith.divf %87, %86 : vector<32x128xf32>
    %89 = arith.mulf %80, %88 : vector<32x128xf32>
    %c0_40 = arith.constant 0 : index
    %c0_41 = arith.constant 0 : index
    %c1_42 = arith.constant 1 : index
    %90 = vector.load %arg1[%c0_40, %c0_41, %c1_42] : memref<1x32x130xf32, #tpu.memory_space<vmem>>, vector<1x32x128xf32>
    %91 = vector.shape_cast %90 : vector<1x32x128xf32> to vector<32x128xf32>
    %c0_43 = arith.constant 0 : index
    %c0_44 = arith.constant 0 : index
    %92 = vector.load %arg10[%c0_43, %c0_44] : memref<32x1xf32, #tpu.memory_space<vmem>>, vector<32x1xf32>
    %93 = vector.broadcast %92 : vector<32x1xf32> to vector<32x128xf32>
    %94 = arith.mulf %93, %89 : vector<32x128xf32>
    %95 = arith.addf %91, %94 : vector<32x128xf32>
    %c0_45 = arith.constant 0 : index
    %c0_46 = arith.constant 0 : index
    %c0_47 = arith.constant 0 : index
    %96 = vector.load %arg11[%c0_45, %c0_46, %c0_47] : memref<1x32x128xf32, #tpu.memory_space<vmem>>, vector<1x32x128xf32>
    %97 = vector.shape_cast %96 : vector<1x32x128xf32> to vector<32x128xf32>
    %98 = vector.shape_cast %95 : vector<32x128xf32> to vector<1x32x128xf32>
    tpu.vector_store %arg11[%c0_45, %c0_46, %c0_47], %98 {strides = array<i32>} : memref<1x32x128xf32, #tpu.memory_space<vmem>>, vector<1x32x128xf32>,
    return
  }
  func.func @transform_0(%arg0: i32) -> (i32, i32, i32) {
    %c0_i32 = arith.constant 0 : i32
    %c0_i32_0 = arith.constant 0 : i32
    %c0_i32_1 = arith.constant 0 : i32
    return %arg0, %c0_i32, %c0_i32_0 : i32, i32, i32
  }
  func.func @transform_1(%arg0: i32) -> (i32, i32) {
    %c0_i32 = arith.constant 0 : i32
    %c0_i32_0 = arith.constant 0 : i32
    %c0_i32_1 = arith.constant 0 : i32
    return %c0_i32, %c0_i32_0 : i32, i32
  }
  func.func @transform_2(%arg0: i32) -> (i32, i32) {
    %c0_i32 = arith.constant 0 : i32
    %c0_i32_0 = arith.constant 0 : i32
    %c0_i32_1 = arith.constant 0 : i32
    return %c0_i32, %c0_i32_0 : i32, i32
  }
  func.func @transform_3(%arg0: i32) -> (i32, i32) {
    %c0_i32 = arith.constant 0 : i32
    %c0_i32_0 = arith.constant 0 : i32
    %c0_i32_1 = arith.constant 0 : i32
    return %c0_i32, %c0_i32_0 : i32, i32
  }
  func.func @transform_4(%arg0: i32) -> (i32, i32) {
    %c0_i32 = arith.constant 0 : i32
    %c0_i32_0 = arith.constant 0 : i32
    %c0_i32_1 = arith.constant 0 : i32
    return %c0_i32, %c0_i32_0 : i32, i32
  }
  func.func @transform_5(%arg0: i32) -> (i32, i32) {
    %c0_i32 = arith.constant 0 : i32
    %c0_i32_0 = arith.constant 0 : i32
    %c0_i32_1 = arith.constant 0 : i32
    return %c0_i32, %c0_i32_0 : i32, i32
  }
  func.func @transform_6(%arg0: i32) -> (i32, i32) {
    %c0_i32 = arith.constant 0 : i32
    %c0_i32_0 = arith.constant 0 : i32
    %c0_i32_1 = arith.constant 0 : i32
    return %c0_i32, %c0_i32_0 : i32, i32
  }
  func.func @transform_7(%arg0: i32) -> (i32, i32) {
    %c0_i32 = arith.constant 0 : i32
    %c0_i32_0 = arith.constant 0 : i32
    %c0_i32_1 = arith.constant 0 : i32
    return %c0_i32, %c0_i32_0 : i32, i32
  }
  func.func @transform_8(%arg0: i32) -> (i32, i32) {
    %c0_i32 = arith.constant 0 : i32
    %c0_i32_0 = arith.constant 0 : i32
    %c0_i32_1 = arith.constant 0 : i32
    return %c0_i32, %c0_i32_0 : i32, i32
  }
  func.func @transform_9(%arg0: i32) -> (i32, i32) {
    %c0_i32 = arith.constant 0 : i32
    %c0_i32_0 = arith.constant 0 : i32
    %c0_i32_1 = arith.constant 0 : i32
    return %c0_i32, %c0_i32_0 : i32, i32
  }
  func.func @transform_10(%arg0: i32) -> (i32, i32, i32) {
    %c0_i32 = arith.constant 0 : i32
    %c0_i32_0 = arith.constant 0 : i32
    %c0_i32_1 = arith.constant 0 : i32
    return %arg0, %c0_i32, %c0_i32_0 : i32, i32, i32
  }
}

module attributes {stable_mosaic.version = 11 : i64} {
  func.func @_dconv_layer_kernel(%arg0: i32, %arg1: memref<1x32x132xf32, #tpu.memory_space<vmem>>, %arg2: memref<8x96xf32, #tpu.memory_space<vmem>>, %arg3: memref<8x1xf32, #tpu.memory_space<vmem>>, %arg4: memref<8x1xf32, #tpu.memory_space<vmem>>, %arg5: memref<8x1xf32, #tpu.memory_space<vmem>>, %arg6: memref<64x8xf32, #tpu.memory_space<vmem>>, %arg7: memref<64x1xf32, #tpu.memory_space<vmem>>, %arg8: memref<64x1xf32, #tpu.memory_space<vmem>>, %arg9: memref<64x1xf32, #tpu.memory_space<vmem>>, %arg10: memref<32x1xf32, #tpu.memory_space<vmem>>, %arg11: memref<1x32x128xf32, #tpu.memory_space<vmem>>) attributes {dimension_semantics = [#tpu.dimension_semantics<parallel>], iteration_bounds = array<i64: 2>, scalar_prefetch = 0 : i64, scratch_operands = 0 : i64, tpu.core_type = #tpu.core_type<tc>, window_params = [{transform_indices = @transform_0, window_bounds = array<i64: 1, 32, 132>}, {pipeline_mode = #tpu.pipeline_mode<synchronous>, transform_indices = @transform_1, window_bounds = array<i64: 8, 96>}, {pipeline_mode = #tpu.pipeline_mode<synchronous>, transform_indices = @transform_2, window_bounds = array<i64: 8, 1>}, {pipeline_mode = #tpu.pipeline_mode<synchronous>, transform_indices = @transform_3, window_bounds = array<i64: 8, 1>}, {pipeline_mode = #tpu.pipeline_mode<synchronous>, transform_indices = @transform_4, window_bounds = array<i64: 8, 1>}, {pipeline_mode = #tpu.pipeline_mode<synchronous>, transform_indices = @transform_5, window_bounds = array<i64: 64, 8>}, {pipeline_mode = #tpu.pipeline_mode<synchronous>, transform_indices = @transform_6, window_bounds = array<i64: 64, 1>}, {pipeline_mode = #tpu.pipeline_mode<synchronous>, transform_indices = @transform_7, window_bounds = array<i64: 64, 1>}, {pipeline_mode = #tpu.pipeline_mode<synchronous>, transform_indices = @transform_8, window_bounds = array<i64: 64, 1>}, {pipeline_mode = #tpu.pipeline_mode<synchronous>, transform_indices = @transform_9, window_bounds = array<i64: 32, 1>}, {transform_indices = @transform_10, window_bounds = array<i64: 1, 32, 128>}]} {
    %c0 = arith.constant 0 : index
    %c0_0 = arith.constant 0 : index
    %c0_1 = arith.constant 0 : index
    %0 = vector.load %arg1[%c0, %c0_0, %c0_1] : memref<1x32x132xf32, #tpu.memory_space<vmem>>, vector<1x32x128xf32>
    %1 = vector.shape_cast %0 : vector<1x32x128xf32> to vector<32x128xf32>
    %c0_2 = arith.constant 0 : index
    %c0_3 = arith.constant 0 : index
    %c2 = arith.constant 2 : index
    %2 = vector.load %arg1[%c0_2, %c0_3, %c2] : memref<1x32x132xf32, #tpu.memory_space<vmem>>, vector<1x32x128xf32>
    %3 = vector.shape_cast %2 : vector<1x32x128xf32> to vector<32x128xf32>
    %c0_4 = arith.constant 0 : index
    %c0_5 = arith.constant 0 : index
    %c4 = arith.constant 4 : index
    %4 = vector.load %arg1[%c0_4, %c0_5, %c4] : memref<1x32x132xf32, #tpu.memory_space<vmem>>, vector<1x32x128xf32>
    %5 = vector.shape_cast %4 : vector<1x32x128xf32> to vector<32x128xf32>
    %6 = tpu.concatenate %1, %3, %5 in 0 : vector<32x128xf32>, vector<32x128xf32>, vector<32x128xf32> -> vector<96x128xf32>
    %c0_6 = arith.constant 0 : index
    %c0_7 = arith.constant 0 : index
    %7 = vector.load %arg2[%c0_6, %c0_7] : memref<8x96xf32, #tpu.memory_space<vmem>>, vector<8x96xf32>
    %cst = arith.constant dense<0.000000e+00> : vector<8x128xf32>
    %8 = tpu.matmul %7, %6, %cst {dimension_numbers = #tpu.dot_dimension_numbers<[1], [0], [0], [1], [0, 0, 1, 1], [], []>} : vector<8x96xf32>, vector<96x128xf32>, vector<8x128xf32> -> vector<8x128xf32>
    %c0_8 = arith.constant 0 : index
    %c0_9 = arith.constant 0 : index
    %9 = vector.load %arg3[%c0_8, %c0_9] : memref<8x1xf32, #tpu.memory_space<vmem>>, vector<8x1xf32>
    %10 = vector.broadcast %9 : vector<8x1xf32> to vector<8x128xf32>
    %11 = arith.addf %8, %10 : vector<8x128xf32>
    %c0_10 = arith.constant 0 : index
    %c0_11 = arith.constant 0 : index
    %12 = vector.load %arg4[%c0_10, %c0_11] : memref<8x1xf32, #tpu.memory_space<vmem>>, vector<8x1xf32>
    %c0_12 = arith.constant 0 : index
    %c0_13 = arith.constant 0 : index
    %13 = vector.load %arg5[%c0_12, %c0_13] : memref<8x1xf32, #tpu.memory_space<vmem>>, vector<8x1xf32>
    %14 = vector.shape_cast %11 : vector<8x128xf32> to vector<1x8x128xf32>
    %cst_14 = arith.constant dense<0.000000e+00> : vector<1xf32>
    %15 = vector.multi_reduction <add>, %14, %cst_14 [1, 2] : vector<1x8x128xf32> to vector<1xf32>
    %16 = vector.shape_cast %15 : vector<1xf32> to vector<1x1x1xf32>
    %17 = vector.extract %16[0, 0, 0] : f32 from vector<1x1x1xf32>
    %cst_15 = arith.constant 1.024000e+03 : f32
    %18 = arith.divf %17, %cst_15 : f32
    %19 = vector.broadcast %18 : f32 to vector<8x128xf32>
    %20 = arith.subf %11, %19 : vector<8x128xf32>
    %21 = arith.mulf %20, %20 : vector<8x128xf32>
    %22 = vector.shape_cast %21 : vector<8x128xf32> to vector<1x8x128xf32>
    %cst_16 = arith.constant dense<0.000000e+00> : vector<1xf32>
    %23 = vector.multi_reduction <add>, %22, %cst_16 [1, 2] : vector<1x8x128xf32> to vector<1xf32>
    %24 = vector.shape_cast %23 : vector<1xf32> to vector<1x1x1xf32>
    %25 = vector.extract %24[0, 0, 0] : f32 from vector<1x1x1xf32>
    %cst_17 = arith.constant 1.024000e+03 : f32
    %26 = arith.divf %25, %cst_17 : f32
    %27 = vector.broadcast %18 : f32 to vector<8x128xf32>
    %28 = arith.subf %11, %27 : vector<8x128xf32>
    %cst_18 = arith.constant 9.99999974E-6 : f32
    %29 = arith.addf %26, %cst_18 : f32
    %30 = math.rsqrt %29 : f32
    %31 = vector.broadcast %30 : f32 to vector<8x128xf32>
    %32 = arith.mulf %28, %31 : vector<8x128xf32>
    %33 = vector.broadcast %12 : vector<8x1xf32> to vector<8x128xf32>
    %34 = arith.mulf %32, %33 : vector<8x128xf32>
    %35 = vector.broadcast %13 : vector<8x1xf32> to vector<8x128xf32>
    %36 = arith.addf %34, %35 : vector<8x128xf32>
    %cst_19 = arith.constant 5.000000e-01 : f32
    %37 = vector.broadcast %cst_19 : f32 to vector<8x128xf32>
    %38 = arith.mulf %37, %36 : vector<8x128xf32>
    %cst_20 = arith.constant 4.471500e-02 : f32
    %39 = vector.broadcast %cst_20 : f32 to vector<8x128xf32>
    %40 = arith.mulf %39, %36 : vector<8x128xf32>
    %41 = arith.mulf %40, %36 : vector<8x128xf32>
    %42 = arith.mulf %41, %36 : vector<8x128xf32>
    %43 = arith.addf %36, %42 : vector<8x128xf32>
    %cst_21 = arith.constant 0.797884583 : f32
    %44 = vector.broadcast %cst_21 : f32 to vector<8x128xf32>
    %45 = arith.mulf %44, %43 : vector<8x128xf32>
    %46 = math.tanh %45 : vector<8x128xf32>
    %cst_22 = arith.constant 1.000000e+00 : f32
    %47 = vector.broadcast %cst_22 : f32 to vector<8x128xf32>
    %48 = arith.addf %47, %46 : vector<8x128xf32>
    %49 = arith.mulf %38, %48 : vector<8x128xf32>
    %c0_23 = arith.constant 0 : index
    %c0_24 = arith.constant 0 : index
    %50 = vector.load %arg6[%c0_23, %c0_24] : memref<64x8xf32, #tpu.memory_space<vmem>>, vector<64x8xf32>
    %cst_25 = arith.constant dense<0.000000e+00> : vector<64x128xf32>
    %51 = tpu.matmul %50, %49, %cst_25 {dimension_numbers = #tpu.dot_dimension_numbers<[1], [0], [0], [1], [0, 0, 1, 1], [], []>} : vector<64x8xf32>, vector<8x128xf32>, vector<64x128xf32> -> vector<64x128xf32>
    %c0_26 = arith.constant 0 : index
    %c0_27 = arith.constant 0 : index
    %52 = vector.load %arg7[%c0_26, %c0_27] : memref<64x1xf32, #tpu.memory_space<vmem>>, vector<64x1xf32>
    %53 = vector.broadcast %52 : vector<64x1xf32> to vector<64x128xf32>
    %54 = arith.addf %51, %53 : vector<64x128xf32>
    %c0_28 = arith.constant 0 : index
    %c0_29 = arith.constant 0 : index
    %55 = vector.load %arg8[%c0_28, %c0_29] : memref<64x1xf32, #tpu.memory_space<vmem>>, vector<64x1xf32>
    %c0_30 = arith.constant 0 : index
    %c0_31 = arith.constant 0 : index
    %56 = vector.load %arg9[%c0_30, %c0_31] : memref<64x1xf32, #tpu.memory_space<vmem>>, vector<64x1xf32>
    %57 = vector.shape_cast %54 : vector<64x128xf32> to vector<1x64x128xf32>
    %cst_32 = arith.constant dense<0.000000e+00> : vector<1xf32>
    %58 = vector.multi_reduction <add>, %57, %cst_32 [1, 2] : vector<1x64x128xf32> to vector<1xf32>
    %59 = vector.shape_cast %58 : vector<1xf32> to vector<1x1x1xf32>
    %60 = vector.extract %59[0, 0, 0] : f32 from vector<1x1x1xf32>
    %cst_33 = arith.constant 8.192000e+03 : f32
    %61 = arith.divf %60, %cst_33 : f32
    %62 = vector.broadcast %61 : f32 to vector<64x128xf32>
    %63 = arith.subf %54, %62 : vector<64x128xf32>
    %64 = arith.mulf %63, %63 : vector<64x128xf32>
    %65 = vector.shape_cast %64 : vector<64x128xf32> to vector<1x64x128xf32>
    %cst_34 = arith.constant dense<0.000000e+00> : vector<1xf32>
    %66 = vector.multi_reduction <add>, %65, %cst_34 [1, 2] : vector<1x64x128xf32> to vector<1xf32>
    %67 = vector.shape_cast %66 : vector<1xf32> to vector<1x1x1xf32>
    %68 = vector.extract %67[0, 0, 0] : f32 from vector<1x1x1xf32>
    %cst_35 = arith.constant 8.192000e+03 : f32
    %69 = arith.divf %68, %cst_35 : f32
    %70 = vector.broadcast %61 : f32 to vector<64x128xf32>
    %71 = arith.subf %54, %70 : vector<64x128xf32>
    %cst_36 = arith.constant 9.99999974E-6 : f32
    %72 = arith.addf %69, %cst_36 : f32
    %73 = math.rsqrt %72 : f32
    %74 = vector.broadcast %73 : f32 to vector<64x128xf32>
    %75 = arith.mulf %71, %74 : vector<64x128xf32>
    %76 = vector.broadcast %55 : vector<64x1xf32> to vector<64x128xf32>
    %77 = arith.mulf %75, %76 : vector<64x128xf32>
    %78 = vector.broadcast %56 : vector<64x1xf32> to vector<64x128xf32>
    %79 = arith.addf %77, %78 : vector<64x128xf32>
    %80 = vector.extract_strided_slice %79 {offsets = [0, 0], sizes = [32, 128], strides = [1, 1]} : vector<64x128xf32> to vector<32x128xf32>
    %81 = vector.extract_strided_slice %79 {offsets = [32, 0], sizes = [32, 128], strides = [1, 1]} : vector<64x128xf32> to vector<32x128xf32>
    %cst_37 = arith.constant 0.000000e+00 : f32
    %82 = vector.broadcast %cst_37 : f32 to vector<32x128xf32>
    %83 = arith.subf %82, %81 : vector<32x128xf32>
    %84 = math.exp %83 : vector<32x128xf32>
    %cst_38 = arith.constant 1.000000e+00 : f32
    %85 = vector.broadcast %cst_38 : f32 to vector<32x128xf32>
    %86 = arith.addf %85, %84 : vector<32x128xf32>
    %cst_39 = arith.constant 1.000000e+00 : f32
    %87 = vector.broadcast %cst_39 : f32 to vector<32x128xf32>
    %88 = arith.divf %87, %86 : vector<32x128xf32>
    %89 = arith.mulf %80, %88 : vector<32x128xf32>
    %c0_40 = arith.constant 0 : index
    %c0_41 = arith.constant 0 : index
    %c2_42 = arith.constant 2 : index
    %90 = vector.load %arg1[%c0_40, %c0_41, %c2_42] : memref<1x32x132xf32, #tpu.memory_space<vmem>>, vector<1x32x128xf32>
    %91 = vector.shape_cast %90 : vector<1x32x128xf32> to vector<32x128xf32>
    %c0_43 = arith.constant 0 : index
    %c0_44 = arith.constant 0 : index
    %92 = vector.load %arg10[%c0_43, %c0_44] : memref<32x1xf32, #tpu.memory_space<vmem>>, vector<32x1xf32>
    %93 = vector.broadcast %92 : vector<32x1xf32> to vector<32x128xf32>
    %94 = arith.mulf %93, %89 : vector<32x128xf32>
    %95 = arith.addf %91, %94 : vector<32x128xf32>
    %c0_45 = arith.constant 0 : index
    %c0_46 = arith.constant 0 : index
    %c0_47 = arith.constant 0 : index
    %96 = vector.load %arg11[%c0_45, %c0_46, %c0_47] : memref<1x32x128xf32, #tpu.memory_space<vmem>>, vector<1x32x128xf32>
    %97 = vector.shape_cast %96 : vector<1x32x128xf32> to vector<32x128xf32>
    %98 = vector.shape_cast %95 : vector<32x128xf32> to vector<1x32x128xf32>
    tpu.vector_store %arg11[%c0_45, %c0_46, %c0_47], %98 {strides = array<i32>} : memref<1x32x128xf32, #tpu.memory_space<vmem>>, vector<1x32x128xf32>,
    return
  }
  func.func @transform_0(%arg0: i32) -> (i32, i32, i32) {
    %c0_i32 = arith.constant 0 : i32
    %c0_i32_0 = arith.constant 0 : i32
    %c0_i32_1 = arith.constant 0 : i32
    return %arg0, %c0_i32, %c0_i32_0 : i32, i32, i32
  }
  func.func @transform_1(%arg0: i32) -> (i32, i32) {
    %c0_i32 = arith.constant 0 : i32
    %c0_i32_0 = arith.constant 0 : i32
    %c0_i32_1 = arith.constant 0 : i32
    return %c0_i32, %c0_i32_0 : i32, i32
  }
  func.func @transform_2(%arg0: i32) -> (i32, i32) {
    %c0_i32 = arith.constant 0 : i32
    %c0_i32_0 = arith.constant 0 : i32
    %c0_i32_1 = arith.constant 0 : i32
    return %c0_i32, %c0_i32_0 : i32, i32
  }
  func.func @transform_3(%arg0: i32) -> (i32, i32) {
    %c0_i32 = arith.constant 0 : i32
    %c0_i32_0 = arith.constant 0 : i32
    %c0_i32_1 = arith.constant 0 : i32
    return %c0_i32, %c0_i32_0 : i32, i32
  }
  func.func @transform_4(%arg0: i32) -> (i32, i32) {
    %c0_i32 = arith.constant 0 : i32
    %c0_i32_0 = arith.constant 0 : i32
    %c0_i32_1 = arith.constant 0 : i32
    return %c0_i32, %c0_i32_0 : i32, i32
  }
  func.func @transform_5(%arg0: i32) -> (i32, i32) {
    %c0_i32 = arith.constant 0 : i32
    %c0_i32_0 = arith.constant 0 : i32
    %c0_i32_1 = arith.constant 0 : i32
    return %c0_i32, %c0_i32_0 : i32, i32
  }
  func.func @transform_6(%arg0: i32) -> (i32, i32) {
    %c0_i32 = arith.constant 0 : i32
    %c0_i32_0 = arith.constant 0 : i32
    %c0_i32_1 = arith.constant 0 : i32
    return %c0_i32, %c0_i32_0 : i32, i32
  }
  func.func @transform_7(%arg0: i32) -> (i32, i32) {
    %c0_i32 = arith.constant 0 : i32
    %c0_i32_0 = arith.constant 0 : i32
    %c0_i32_1 = arith.constant 0 : i32
    return %c0_i32, %c0_i32_0 : i32, i32
  }
  func.func @transform_8(%arg0: i32) -> (i32, i32) {
    %c0_i32 = arith.constant 0 : i32
    %c0_i32_0 = arith.constant 0 : i32
    %c0_i32_1 = arith.constant 0 : i32
    return %c0_i32, %c0_i32_0 : i32, i32
  }
  func.func @transform_9(%arg0: i32) -> (i32, i32) {
    %c0_i32 = arith.constant 0 : i32
    %c0_i32_0 = arith.constant 0 : i32
    %c0_i32_1 = arith.constant 0 : i32
    return %c0_i32, %c0_i32_0 : i32, i32
  }
  func.func @transform_10(%arg0: i32) -> (i32, i32, i32) {
    %c0_i32 = arith.constant 0 : i32
    %c0_i32_0 = arith.constant 0 : i32
    %c0_i32_1 = arith.constant 0 : i32
    return %arg0, %c0_i32, %c0_i32_0 : i32, i32, i32
  }
}

</mosaic_0001>

<llo_original>
// kernel: dconv_forward.2
$region0: #{dconv_forward.2}
  #allocation0 [shape = 'u32[]', space=smem, size = 0x4, offset = 0x4, fixed_abs, tag = 'smem constant byte address 0x4 - core index']
  #allocation1 [shape = 'u32[144,128]{1,0:T(1,128)}', space=vmem, size = 0x12000, scoped, tag = 'internal scratch']
  %s0 = inlined_call_operand.vmem [shape: f32[2,32,130], index: 0, kind: input, shape index: {}]
  %s1 = inlined_call_operand.vmem [shape: f32[8,96], index: 1, kind: input, shape index: {}]
  %s2 = inlined_call_operand.vmem [shape: f32[8,1], index: 2, kind: input, shape index: {}]
  %s3 = inlined_call_operand.vmem [shape: f32[8,1], index: 3, kind: input, shape index: {}]
  %s4 = inlined_call_operand.vmem [shape: f32[8,1], index: 4, kind: input, shape index: {}]
  %s5 = inlined_call_operand.vmem [shape: f32[64,8], index: 5, kind: input, shape index: {}]
  %s6 = inlined_call_operand.vmem [shape: f32[64,1], index: 6, kind: input, shape index: {}]
  %s7 = inlined_call_operand.vmem [shape: f32[64,1], index: 7, kind: input, shape index: {}]
  %s8 = inlined_call_operand.vmem [shape: f32[64,1], index: 8, kind: input, shape index: {}]
  %s9 = inlined_call_operand.vmem [shape: f32[32,1], index: 9, kind: input, shape index: {}]
  %s10 = inlined_call_operand.vmem [shape: f32[2,32,128], index: 10, kind: output, shape index: {}]
  %s11 = sld [smem:[#allocation0]]
  $region73: #{dconv_forward.2} parent=0
    _
  %s13 = ssub.s32 1, %s11
  %s14 = scalar_select 0, %s13, %s11
  loop: start=0, step=1, limit=4
  $region2: #{dconv_forward.2} parent=0 // loop_pre_header
    _
  $region3: #{dconv_forward.2} parent=0 // loop_header
    %s16 = sphi 0, %s20
    %p17 = scmp.ge.s32.totalorder %s16, 4
    %s26 = sphi 0, %s28
    %s29 = sphi 0, %s26
    %s30 = sphi 0, %s29
    %s46 = sphi 0, %s30
    %s50 = sphi 0, %s50
    %s52 = sphi 0, %s50
    %s53 = sphi 0, %s52
    %s67 = sphi 0, %s53
    %s71 = sphi 0, %s71
    %s73 = sphi 0, %s71
    %s74 = sphi 0, %s73
    %s88 = sphi 0, %s74
    %s92 = sphi 0, %s92
    %s94 = sphi 0, %s92
    %s95 = sphi 0, %s94
    %s109 = sphi 0, %s95
    %s113 = sphi 0, %s113
    %s115 = sphi 0, %s113
    %s116 = sphi 0, %s115
    %s130 = sphi 0, %s116
    %s134 = sphi 0, %s134
    %s136 = sphi 0, %s134
    %s137 = sphi 0, %s136
    %s151 = sphi 0, %s137
    %s155 = sphi 0, %s155
    %s157 = sphi 0, %s155
    %s158 = sphi 0, %s157
    %s172 = sphi 0, %s158
    %s176 = sphi 0, %s176
    %s178 = sphi 0, %s176
    %s179 = sphi 0, %s178
    %s193 = sphi 0, %s179
    %s197 = sphi 0, %s197
    %s199 = sphi 0, %s197
    %s200 = sphi 0, %s199
    %s214 = sphi 0, %s200
    %s218 = sphi 0, %s218
    %s220 = sphi 0, %s218
    %s221 = sphi 0, %s220
    %s235 = sphi 0, %s221
    %s241 = sphi 0, %s243
    %s244 = sphi 0, %s241
    %s245 = sphi 0, %s244
    %s261 = sphi 0, %s245
  $region4: #{dconv_forward.2} parent=0 // loop_header_branch
    %19 = sbr.rel (%p17) target = $region8
  $region5: #{dconv_forward.2} parent=0 // loop_body
    %s21 = ssub.s32 %s16, 1
    %s22 = ssub.s32 %s16, 2
    %s23 = sadd.s32 %s16, 1
    %s24 = ssub.s32 %s16, %s23
    %p25 = scmp.eq.s32.totalorder %s24, 0
    %s27 = sadd.s32 %s26, 1
    %s28 = scalar_select %p25, %s26, %s27
    %p31 = pneg %p25
    %p32 = scmp.eq.s32.totalorder %s16, 1
    %p33 = por %p31, %p32
    %p34 = scmp.ne.s32.totalorder %s26, %s29
    %p35 = scmp.eq.s32.totalorder %s16, 0
    %p36 = por %p34, %p35
    %p37 = scmp.ne.s32.totalorder %s26, %s29
    %p38 = scmp.eq.s32.totalorder %s21, 1
    %p39 = por %p37, %p38
    %p40 = scmp.ne.s32.totalorder %s29, %s30
    %p41 = scmp.eq.s32.totalorder %s21, 0
    %p42 = por %p40, %p41
    %p43 = scmp.ne.s32.totalorder %s29, %s30
    %p44 = scmp.eq.s32.totalorder %s22, 1
    %p45 = por %p43, %p44
    %p47 = scmp.ne.s32.totalorder %s30, %s46
    %p48 = scmp.eq.s32.totalorder %s22, 0
    %p49 = por %p47, %p48
    %s51 = sadd.s32 %s50, 1
    %p54 = scmp.eq.s32.totalorder %s16, 1
    %p55 = scmp.ne.s32.totalorder %s50, %s52
    %p56 = scmp.eq.s32.totalorder %s16, 0
    %p57 = por %p55, %p56
    %p58 = scmp.ne.s32.totalorder %s50, %s52
    %p59 = scmp.eq.s32.totalorder %s21, 1
    %p60 = por %p58, %p59
    %p61 = scmp.ne.s32.totalorder %s52, %s53
    %p62 = scmp.eq.s32.totalorder %s21, 0
    %p63 = por %p61, %p62
    %p64 = scmp.ne.s32.totalorder %s52, %s53
    %p65 = scmp.eq.s32.totalorder %s22, 1
    %p66 = por %p64, %p65
    %p68 = scmp.ne.s32.totalorder %s53, %s67
    %p69 = scmp.eq.s32.totalorder %s22, 0
    %p70 = por %p68, %p69
    %s72 = sadd.s32 %s71, 1
    %p75 = scmp.eq.s32.totalorder %s16, 1
    %p76 = scmp.ne.s32.totalorder %s71, %s73
    %p77 = scmp.eq.s32.totalorder %s16, 0
    %p78 = por %p76, %p77
    %p79 = scmp.ne.s32.totalorder %s71, %s73
    %p80 = scmp.eq.s32.totalorder %s21, 1
    %p81 = por %p79, %p80
    %p82 = scmp.ne.s32.totalorder %s73, %s74
    %p83 = scmp.eq.s32.totalorder %s21, 0
    %p84 = por %p82, %p83
    %p85 = scmp.ne.s32.totalorder %s73, %s74
    %p86 = scmp.eq.s32.totalorder %s22, 1
    %p87 = por %p85, %p86
    %p89 = scmp.ne.s32.totalorder %s74, %s88
    %p90 = scmp.eq.s32.totalorder %s22, 0
    %p91 = por %p89, %p90
    %s93 = sadd.s32 %s92, 1
    %p96 = scmp.eq.s32.totalorder %s16, 1
    %p97 = scmp.ne.s32.totalorder %s92, %s94
    %p98 = scmp.eq.s32.totalorder %s16, 0
    %p99 = por %p97, %p98
    %p100 = scmp.ne.s32.totalorder %s92, %s94
    %p101 = scmp.eq.s32.totalorder %s21, 1
    %p102 = por %p100, %p101
    %p103 = scmp.ne.s32.totalorder %s94, %s95
    %p104 = scmp.eq.s32.totalorder %s21, 0
    %p105 = por %p103, %p104
    %p106 = scmp.ne.s32.totalorder %s94, %s95
    %p107 = scmp.eq.s32.totalorder %s22, 1
    %p108 = por %p106, %p107
    %p110 = scmp.ne.s32.totalorder %s95, %s109
    %p111 = scmp.eq.s32.totalorder %s22, 0
    %p112 = por %p110, %p111
    %s114 = sadd.s32 %s113, 1
    %p117 = scmp.eq.s32.totalorder %s16, 1
    %p118 = scmp.ne.s32.totalorder %s113, %s115
    %p119 = scmp.eq.s32.totalorder %s16, 0
    %p120 = por %p118, %p119
    %p121 = scmp.ne.s32.totalorder %s113, %s115
    %p122 = scmp.eq.s32.totalorder %s21, 1
    %p123 = por %p121, %p122
    %p124 = scmp.ne.s32.totalorder %s115, %s116
    %p125 = scmp.eq.s32.totalorder %s21, 0
    %p126 = por %p124, %p125
    %p127 = scmp.ne.s32.totalorder %s115, %s116
    %p128 = scmp.eq.s32.totalorder %s22, 1
    %p129 = por %p127, %p128
    %p131 = scmp.ne.s32.totalorder %s116, %s130
    %p132 = scmp.eq.s32.totalorder %s22, 0
    %p133 = por %p131, %p132
    %s135 = sadd.s32 %s134, 1
    %p138 = scmp.eq.s32.totalorder %s16, 1
    %p139 = scmp.ne.s32.totalorder %s134, %s136
    %p140 = scmp.eq.s32.totalorder %s16, 0
    %p141 = por %p139, %p140
    %p142 = scmp.ne.s32.totalorder %s134, %s136
    %p143 = scmp.eq.s32.totalorder %s21, 1
    %p144 = por %p142, %p143
    %p145 = scmp.ne.s32.totalorder %s136, %s137
    %p146 = scmp.eq.s32.totalorder %s21, 0
    %p147 = por %p145, %p146
    %p148 = scmp.ne.s32.totalorder %s136, %s137
    %p149 = scmp.eq.s32.totalorder %s22, 1
    %p150 = por %p148, %p149
    %p152 = scmp.ne.s32.totalorder %s137, %s151
    %p153 = scmp.eq.s32.totalorder %s22, 0
    %p154 = por %p152, %p153
    %s156 = sadd.s32 %s155, 1
    %p159 = scmp.eq.s32.totalorder %s16, 1
    %p160 = scmp.ne.s32.totalorder %s155, %s157
    %p161 = scmp.eq.s32.totalorder %s16, 0
    %p162 = por %p160, %p161
    %p163 = scmp.ne.s32.totalorder %s155, %s157
    %p164 = scmp.eq.s32.totalorder %s21, 1
    %p165 = por %p163, %p164
    %p166 = scmp.ne.s32.totalorder %s157, %s158
    %p167 = scmp.eq.s32.totalorder %s21, 0
    %p168 = por %p166, %p167
    %p169 = scmp.ne.s32.totalorder %s157, %s158
    %p170 = scmp.eq.s32.totalorder %s22, 1
    %p171 = por %p169, %p170
    %p173 = scmp.ne.s32.totalorder %s158, %s172
    %p174 = scmp.eq.s32.totalorder %s22, 0
    %p175 = por %p173, %p174
    %s177 = sadd.s32 %s176, 1
    %p180 = scmp.eq.s32.totalorder %s16, 1
    %p181 = scmp.ne.s32.totalorder %s176, %s178
    %p182 = scmp.eq.s32.totalorder %s16, 0
    %p183 = por %p181, %p182
    %p184 = scmp.ne.s32.totalorder %s176, %s178
    %p185 = scmp.eq.s32.totalorder %s21, 1
    %p186 = por %p184, %p185
    %p187 = scmp.ne.s32.totalorder %s178, %s179
    %p188 = scmp.eq.s32.totalorder %s21, 0
    %p189 = por %p187, %p188
    %p190 = scmp.ne.s32.totalorder %s178, %s179
    %p191 = scmp.eq.s32.totalorder %s22, 1
    %p192 = por %p190, %p191
    %p194 = scmp.ne.s32.totalorder %s179, %s193
    %p195 = scmp.eq.s32.totalorder %s22, 0
    %p196 = por %p194, %p195
    %s198 = sadd.s32 %s197, 1
    %p201 = scmp.eq.s32.totalorder %s16, 1
    %p202 = scmp.ne.s32.totalorder %s197, %s199
    %p203 = scmp.eq.s32.totalorder %s16, 0
    %p204 = por %p202, %p203
    %p205 = scmp.ne.s32.totalorder %s197, %s199
    %p206 = scmp.eq.s32.totalorder %s21, 1
    %p207 = por %p205, %p206
    %p208 = scmp.ne.s32.totalorder %s199, %s200
    %p209 = scmp.eq.s32.totalorder %s21, 0
    %p210 = por %p208, %p209
    %p211 = scmp.ne.s32.totalorder %s199, %s200
    %p212 = scmp.eq.s32.totalorder %s22, 1
    %p213 = por %p211, %p212
    %p215 = scmp.ne.s32.totalorder %s200, %s214
    %p216 = scmp.eq.s32.totalorder %s22, 0
    %p217 = por %p215, %p216
    %s219 = sadd.s32 %s218, 1
    %p222 = scmp.eq.s32.totalorder %s16, 1
    %p223 = scmp.ne.s32.totalorder %s218, %s220
    %p224 = scmp.eq.s32.totalorder %s16, 0
    %p225 = por %p223, %p224
    %p226 = scmp.ne.s32.totalorder %s218, %s220
    %p227 = scmp.eq.s32.totalorder %s21, 1
    %p228 = por %p226, %p227
    %p229 = scmp.ne.s32.totalorder %s220, %s221
    %p230 = scmp.eq.s32.totalorder %s21, 0
    %p231 = por %p229, %p230
    %p232 = scmp.ne.s32.totalorder %s220, %s221
    %p233 = scmp.eq.s32.totalorder %s22, 1
    %p234 = por %p232, %p233
    %p236 = scmp.ne.s32.totalorder %s221, %s235
    %p237 = scmp.eq.s32.totalorder %s22, 0
    %p238 = por %p236, %p237
    %s239 = ssub.s32 %s16, %s23
    %p240 = scmp.eq.s32.totalorder %s239, 0
    %s242 = sadd.s32 %s241, 1
    %s243 = scalar_select %p240, %s241, %s242
    %p246 = pneg %p240
    %p247 = scmp.eq.s32.totalorder %s16, 1
    %p248 = por %p246, %p247
    %p249 = scmp.ne.s32.totalorder %s241, %s244
    %p250 = scmp.eq.s32.totalorder %s16, 0
    %p251 = por %p249, %p250
    %p252 = scmp.ne.s32.totalorder %s241, %s244
    %p253 = scmp.eq.s32.totalorder %s21, 1
    %p254 = por %p252, %p253
    %p255 = scmp.ne.s32.totalorder %s244, %s245
    %p256 = scmp.eq.s32.totalorder %s21, 0
    %p257 = por %p255, %p256
    %p258 = scmp.ne.s32.totalorder %s244, %s245
    %p259 = scmp.eq.s32.totalorder %s22, 1
    %p260 = por %p258, %p259
    %p262 = scmp.ne.s32.totalorder %s245, %s261
    %p263 = scmp.eq.s32.totalorder %s22, 0
    %p264 = por %p262, %p263
    %p265 = scmp.le.s32.totalorder 1, %s16
    %p266 = scmp.lt.s32.totalorder %s16, 3
    %p267 = pnand %p265, %p266
    %p268 = pneg %p267
    // Predicated region
    $region9: #{dconv_forward.2} parent=5 // pred_check
      _
    $region10: #{dconv_forward.2} parent=5 // pred_check_branch
      %270 = sbr.rel (%p267) target = $region12
    $region11: #{dconv_forward.2} parent=5 // pred_region
      %s271 = ssub.s32 %s16, 1
      // Predicated region
      $region13: #{dconv_forward.2} parent=11 // pred_check
        %p272 = pneg %p63
      $region14: #{dconv_forward.2} parent=11 // pred_check_branch
        %274 = sbr.rel (%p272) target = $region16
      $region15: #{dconv_forward.2} parent=11 // pred_region
        _
      $region16: #{dconv_forward.2} parent=11 // pred_fallthru
        _
      // Predicated region
      $region17: #{dconv_forward.2} parent=11 // pred_check
        %p275 = pneg %p84
      $region18: #{dconv_forward.2} parent=11 // pred_check_branch
        %277 = sbr.rel (%p275) target = $region20
      $region19: #{dconv_forward.2} parent=11 // pred_region
        _
      $region20: #{dconv_forward.2} parent=11 // pred_fallthru
        _
      // Predicated region
      $region21: #{dconv_forward.2} parent=11 // pred_check
        %p278 = pneg %p105
      $region22: #{dconv_forward.2} parent=11 // pred_check_branch
        %280 = sbr.rel (%p278) target = $region24
      $region23: #{dconv_forward.2} parent=11 // pred_region
        _
      $region24: #{dconv_forward.2} parent=11 // pred_fallthru
        _
      // Predicated region
      $region25: #{dconv_forward.2} parent=11 // pred_check
        %p281 = pneg %p126
      $region26: #{dconv_forward.2} parent=11 // pred_check_branch
        %283 = sbr.rel (%p281) target = $region28
      $region27: #{dconv_forward.2} parent=11 // pred_region
        _
      $region28: #{dconv_forward.2} parent=11 // pred_fallthru
        _
      // Predicated region
      $region29: #{dconv_forward.2} parent=11 // pred_check
        %p284 = pneg %p147
      $region30: #{dconv_forward.2} parent=11 // pred_check_branch
        %286 = sbr.rel (%p284) target = $region32
      $region31: #{dconv_forward.2} parent=11 // pred_region
        _
      $region32: #{dconv_forward.2} parent=11 // pred_fallthru
        _
      // Predicated region
      $region33: #{dconv_forward.2} parent=11 // pred_check
        %p287 = pneg %p168
      $region34: #{dconv_forward.2} parent=11 // pred_check_branch
        %289 = sbr.rel (%p287) target = $region36
      $region35: #{dconv_forward.2} parent=11 // pred_region
        _
      $region36: #{dconv_forward.2} parent=11 // pred_fallthru
        _
      // Predicated region
      $region37: #{dconv_forward.2} parent=11 // pred_check
        %p290 = pneg %p189
      $region38: #{dconv_forward.2} parent=11 // pred_check_branch
        %292 = sbr.rel (%p290) target = $region40
      $region39: #{dconv_forward.2} parent=11 // pred_region
        _
      $region40: #{dconv_forward.2} parent=11 // pred_fallthru
        _
      // Predicated region
      $region41: #{dconv_forward.2} parent=11 // pred_check
        %p293 = pneg %p210
      $region42: #{dconv_forward.2} parent=11 // pred_check_branch
        %295 = sbr.rel (%p293) target = $region44
      $region43: #{dconv_forward.2} parent=11 // pred_region
        _
      $region44: #{dconv_forward.2} parent=11 // pred_fallthru
        _
      // Predicated region
      $region45: #{dconv_forward.2} parent=11 // pred_check
        %p296 = pneg %p231
      $region46: #{dconv_forward.2} parent=11 // pred_check_branch
        %298 = sbr.rel (%p296) target = $region48
      $region47: #{dconv_forward.2} parent=11 // pred_region
        _
      $region48: #{dconv_forward.2} parent=11 // pred_fallthru
        _
    $region12: #{dconv_forward.2} parent=5 // pred_fallthru
      _
    %p299 = scmp.lt.s32.totalorder %s16, 2
    // Predicated region
    $region49: #{dconv_forward.2} parent=5 // pred_check
      %p300 = pneg %p299
    $region50: #{dconv_forward.2} parent=5 // pred_check_branch
      %302 = sbr.rel (%p300) target = $region52
    $region51: #{dconv_forward.2} parent=5 // pred_region
      // Predicated region
      $region53: #{dconv_forward.2} parent=51 // pred_check
        %p303 = pneg %p36
      $region54: #{dconv_forward.2} parent=51 // pred_check_branch
        %305 = sbr.rel (%p303) target = $region56
      $region55: #{dconv_forward.2} parent=51 // pred_region
        %p306 = scmp.lt.s32.totalorder %s16, 1
        %s307 = scalar_select %p306, %s16, 1
        %s308 = smul.addr %s307, 8
        %s309 = smul.addr %s308, 8
        %s310 = scalar_lea.vmem %s0, %s309
      $region56: #{dconv_forward.2} parent=51 // pred_fallthru
        _
    $region52: #{dconv_forward.2} parent=5 // pred_fallthru
      _
    %p311 = scmp.le.s32.totalorder 1, %s16
    %p312 = scmp.lt.s32.totalorder %s16, 3
    %p313 = pnand %p311, %p312
    %p314 = pneg %p313
    // Predicated region
    $region57: #{dconv_forward.2} parent=5 // pred_check
      _
    $region58: #{dconv_forward.2} parent=5 // pred_check_branch
      %316 = sbr.rel (%p313) target = $region60
    $region59: #{dconv_forward.2} parent=5 // pred_region
      %s317 = ssub.s32 %s16, 1
      %p318 = scmp.lt.s32.totalorder %s21, 1
      %s319 = scalar_select %p318, %s21, 1
      %s320 = smul.addr %s319, 8
      %s321 = smul.addr %s320, 8
      %s322 = scalar_lea.vmem %s0, %s321
      %p323 = pneg %p42
      %p324 = pneg %p39
      %p325 = pneg %p63
      %p326 = pneg %p60
      %p327 = pneg %p84
      %p328 = pneg %p81
      %p329 = pneg %p105
      %p330 = pneg %p102
      %p331 = pneg %p126
      %p332 = pneg %p123
      %p333 = pneg %p147
      %p334 = pneg %p144
      %p335 = pneg %p168
      %p336 = pneg %p165
      %p337 = pneg %p189
      %p338 = pneg %p186
      %p339 = pneg %p210
      %p340 = pneg %p207
      %p341 = pneg %p231
      %p342 = pneg %p228
      %p343 = pneg %p257
      %p344 = pneg %p254
      %p345 = scmp.lt.s32.totalorder %s21, 1
      %s346 = scalar_select %p345, %s21, 1
      %s347 = smul.addr %s346, 4
      %s348 = smul.addr %s347, 8
      %s349 = scalar_lea.vmem %s10, %s348
      %p350 = scmp.lt.s32.totalorder %s21, 1
      %s351 = scalar_select %p350, %s21, 1
      %s352 = smul.addr %s351, 8
      %s353 = smul.addr %s352, 8
      %s354 = scalar_lea.vmem %s0, %s353
      %p355 = scmp.lt.s32.totalorder %s21, 1
      %s356 = scalar_select %p355, %s21, 1
      %s357 = smul.addr %s356, 4
      %s358 = smul.addr %s357, 8
      %s359 = scalar_lea.vmem %s10, %s358
      %v360 = vld [vmem:[%s354] sm:$0xff]
      %v361 = vld [vmem:[%s354 + $0x10] sm:$0xff]
      %v362 = vld [vmem:[%s354 + $0x20] sm:$0xff]
      %v363 = vld [vmem:[%s354 + $0x30] sm:$0xff]
      %v364 = vld [vmem:[%s354 + $0x8] sm:$0xff]
      %v365 = vld [vmem:[%s354 + $0x18] sm:$0xff]
      %v366 = vld [vmem:[%s354 + $0x28] sm:$0xff]
      %v367 = vld [vmem:[%s354 + $0x38] sm:$0xff]
      %376 = vrot.lane.b32.xlu0 %v360, 127
      %v377 = vpop.permute.xlu0 %376
      %378 = vrot.lane.b32.xlu0 %v364, 127
      %v379 = vpop.permute.xlu0 %378
      %380 = vrot.lane.b32.xlu0 %v361, 127
      %v381 = vpop.permute.xlu0 %380
      %382 = vrot.lane.b32.xlu0 %v365, 127
      %v383 = vpop.permute.xlu0 %382
      %384 = vrot.lane.b32.xlu0 %v362, 127
      %v385 = vpop.permute.xlu0 %384
      %386 = vrot.lane.b32.xlu0 %v366, 127
      %v387 = vpop.permute.xlu0 %386
      %388 = vrot.lane.b32.xlu0 %v363, 127
      %v389 = vpop.permute.xlu0 %388
      %390 = vrot.lane.b32.xlu0 %v367, 127
      %v391 = vpop.permute.xlu0 %390
      %vm392 = vcmask 1039360
      %v393 = vsel %vm392, %v377, %v379
      %v394 = vsel %vm392, %v381, %v383
      %v395 = vsel %vm392, %v385, %v387
      %v396 = vsel %vm392, %v389, %v391
      %401 = vrot.lane.b32.xlu0 %v360, 126
      %v402 = vpop.permute.xlu0 %401
      %403 = vrot.lane.b32.xlu0 %v364, 126
      %v404 = vpop.permute.xlu0 %403
      %405 = vrot.lane.b32.xlu0 %v361, 126
      %v406 = vpop.permute.xlu0 %405
      %407 = vrot.lane.b32.xlu0 %v365, 126
      %v408 = vpop.permute.xlu0 %407
      %409 = vrot.lane.b32.xlu0 %v362, 126
      %v410 = vpop.permute.xlu0 %409
      %411 = vrot.lane.b32.xlu0 %v366, 126
      %v412 = vpop.permute.xlu0 %411
      %413 = vrot.lane.b32.xlu0 %v363, 126
      %v414 = vpop.permute.xlu0 %413
      %415 = vrot.lane.b32.xlu0 %v367, 126
      %v416 = vpop.permute.xlu0 %415
      %vm417 = vcmask 1031168
      %v418 = vsel %vm417, %v402, %v404
      %v419 = vsel %vm417, %v406, %v408
      %v420 = vsel %vm417, %v410, %v412
      %v421 = vsel %vm417, %v414, %v416
      %v426 = vld [vmem:[%s1] sm:$0xff]
      %v427 = vld [vmem:[%s2] sm:$0xff]
      %429 = vset.pattern.permute.xlu0 0
      %430 = vperm.xlu0 %429, %v427
      %v431 = vpop.permute.xlu0 %430
      %vm433 = vcmask 785408
      %v435 = vsel %vm433, %v426, 0
      %437 = vmatprep.subr.mxu0 0.0
      %438 = vmatpush1.msra.mxu0 %v360
      %439 = vmatprep.subr.mxu0 0.0
      %440 = vmatpush1.msra.mxu0 %v361
      %441 = vmatprep.subr.mxu0 0.0
      %442 = vmatpush1.msra.mxu0 %v362
      %443 = vmatprep.subr.mxu0 0.0
      %444 = vmatpush1.msra.mxu0 %v363
      %445 = vmatprep.subr.mxu0 0.0
      %446 = vmatpush1.msra.mxu0 %v393
      %447 = vmatprep.subr.mxu0 0.0
      %448 = vmatpush1.msra.mxu0 %v394
      %449 = vmatprep.subr.mxu0 0.0
      %450 = vmatpush1.msra.mxu0 %v395
      %451 = vmatprep.subr.mxu0 0.0
      %452 = vmatpush1.msra.mxu0 %v396
      %453 = vmatprep.subr.mxu0 0.0
      %454 = vmatpush1.msra.mxu0 %v418
      %455 = vmatprep.subr.mxu0 0.0
      %456 = vmatpush1.msra.mxu0 %v419
      %457 = vmatprep.subr.mxu0 0.0
      %458 = vmatpush1.msra.mxu0 %v420
      %459 = vmatprep.subr.mxu0 0.0
      %460 = vmatpush1.msra.mxu0 %v421
      %461 = vmatprep.subr.mxu0 0.0
      %462 = vmatpush1.msra.mxu0 0.0
      %463 = vmatprep.subr.mxu0 0.0
      %464 = vmatpush1.msra.mxu0 0.0
      %465 = vmatprep.subr.mxu0 0.0
      %466 = vmatpush1.msra.mxu0 0.0
      %467 = vmatprep.subr.mxu0 0.0
      %468 = vmatpush1.msra.mxu0 0.0
      %469 = vmatprep.subr.mxu0 0.0
      %470 = vmatpush1.msra.mxu0 0.0
      %471 = vmatprep.subr.mxu0 0.0
      %472 = vmatpush1.msra.mxu0 0.0
      %473 = vmatprep.subr.mxu0 0.0
      %474 = vmatpush1.msra.mxu0 0.0
      %475 = vmatprep.subr.mxu0 0.0
      %476 = vmatpush1.msra.mxu0 0.0
      %477 = vmatprep.subr.mxu0 0.0
      %478 = vmatpush1.msra.mxu0 0.0
      %479 = vmatprep.subr.mxu0 0.0
      %480 = vmatpush1.msra.mxu0 0.0
      %481 = vmatprep.subr.mxu0 0.0
      %482 = vmatpush1.msra.mxu0 0.0
      %483 = vmatprep.subr.mxu0 0.0
      %484 = vmatpush1.msra.mxu0 0.0
      %485 = vmatprep.subr.mxu0 0.0
      %486 = vmatpush1.msra.mxu0 0.0
      %487 = vmatprep.subr.mxu0 0.0
      %488 = vmatpush1.msra.mxu0 0.0
      %489 = vmatprep.subr.mxu0 0.0
      %490 = vmatpush1.msra.mxu0 0.0
      %491 = vmatprep.subr.mxu0 0.0
      %492 = vmatpush1.msra.mxu0 0.0
      %493 = vmatprep.subr.mxu0 0.0
      %494 = vmatpush1.msra.mxu0 0.0
      %495 = vmatprep.subr.mxu0 0.0
      %496 = vmatpush1.msra.mxu0 0.0
      %497 = vmatprep.subr.mxu0 0.0
      %498 = vmatpush1.msra.mxu0 0.0
      %499 = vmatprep.subr.mxu0 0.0
      %500 = vmatpush1.msra.mxu0 0.0
      %501 = vmatprep.mubr.f32.mxu0 0.0
      %502 = vmatmul.mubr.f32.gmra.mrb[0].mxu0 %v435
      %v503 = vpop.f32.mrb[0].mxu0
      %v504 = vadd.f32 %v431, %v503
      %v505 = vpop.f32.mrb[0].mxu0
      %506 = vdwg.mxu0
      %v507 = vld [vmem:[%s3] sm:$0xff]
      %v508 = vld [vmem:[%s4] sm:$0xff]
      %509 = vadd.xlane.f32.xlu0 %v504
      %v510 = vpop.xlane.xlu0 %509
      %v511 = vrot.slane %v510, 4
      %v512 = vadd.f32 %v510, %v511
      %v513 = vrot.slane %v512, 2
      %v514 = vadd.f32 %v512, %v513
      %v515 = vrot.slane %v514, 1
      %v516 = vadd.f32 %v514, %v515
      %s517 = vtos %v516
      %v518 = vrcp.pop 1024.0
      %s519 = vtos %v518
      %s520 = smul.f32 %s517, %s519
      %v521 = vstv %s520
      %v522 = vsub.f32 %v504, %v521
      %v523 = vmul.f32 %v522, %v522
      %524 = vadd.xlane.f32.xlu0 %v523
      %v525 = vpop.xlane.xlu0 %524
      %v526 = vrot.slane %v525, 4
      %v527 = vadd.f32 %v525, %v526
      %v528 = vrot.slane %v527, 2
      %v529 = vadd.f32 %v527, %v528
      %v530 = vrot.slane %v529, 1
      %v531 = vadd.f32 %v529, %v530
      %s532 = vtos %v531
      %v533 = vrcp.pop 1024.0
      %s534 = vtos %v533
      %s535 = smul.f32 %s532, %s534
      %s536 = sadd.f32 %s535, 1e-05
      %v537 = vstv %s536
      %v538 = vrsqrt.pop %v537
      %s539 = vtos %v538
      %v540 = vstv %s539
      %v541 = vmul.f32 %v522, %v540
      %543 = vset.pattern.permute.xlu0 0
      %544 = vperm.xlu0 %543, %v507
      %v545 = vpop.permute.xlu0 %544
      %v547 = vmul.f32 %v541, %v545
      %549 = vset.pattern.permute.xlu0 0
      %550 = vperm.xlu0 %549, %v508
      %v551 = vpop.permute.xlu0 %550
      %v553 = vadd.f32 %v547, %v551
      %v554 = vmul.f32 %v553, 0.5
      %v555 = vmul.f32 %v553, 0.044715
      %v556 = vmul.f32 %v555, %v553
      %v557 = vmul.f32 %v556, %v553
      %v558 = vadd.f32 %v553, %v557
      %v559 = vmul.f32 %v558, 0.7978846
      %v560 = vtanh.pop %v559
      %v561 = vadd.f32 %v560, 1.0
      %v562 = vmul.f32 %v554, %v561
      %v563 = vld [vmem:[%s5] sm:$0xff]
      %v564 = vld [vmem:[%s5 + $0x8] sm:$0xff]
      %v565 = vld [vmem:[%s5 + $0x10] sm:$0xff]
      %v566 = vld [vmem:[%s5 + $0x18] sm:$0xff]
      %v567 = vld [vmem:[%s5 + $0x20] sm:$0xff]
      %v568 = vld [vmem:[%s5 + $0x28] sm:$0xff]
      %v569 = vld [vmem:[%s5 + $0x30] sm:$0xff]
      %v570 = vld [vmem:[%s5 + $0x38] sm:$0xff]
      %v571 = vld [vmem:[%s6] sm:$0xff]
      %v572 = vld [vmem:[%s6 + $0x8] sm:$0xff]
      %v573 = vld [vmem:[%s6 + $0x10] sm:$0xff]
      %v574 = vld [vmem:[%s6 + $0x18] sm:$0xff]
      %v575 = vld [vmem:[%s6 + $0x20] sm:$0xff]
      %v576 = vld [vmem:[%s6 + $0x28] sm:$0xff]
      %v577 = vld [vmem:[%s6 + $0x30] sm:$0xff]
      %v578 = vld [vmem:[%s6 + $0x38] sm:$0xff]
      %580 = vset.pattern.permute.xlu0 0
      %581 = vperm.xlu0 %580, %v571
      %v582 = vpop.permute.xlu0 %581
      %585 = vset.pattern.permute.xlu0 0
      %586 = vperm.xlu0 %585, %v572
      %v587 = vpop.permute.xlu0 %586
      %590 = vset.pattern.permute.xlu0 0
      %591 = vperm.xlu0 %590, %v573
      %v592 = vpop.permute.xlu0 %591
      %595 = vset.pattern.permute.xlu0 0
      %596 = vperm.xlu0 %595, %v574
      %v597 = vpop.permute.xlu0 %596
      %600 = vset.pattern.permute.xlu0 0
      %601 = vperm.xlu0 %600, %v575
      %v602 = vpop.permute.xlu0 %601
      %605 = vset.pattern.permute.xlu0 0
      %606 = vperm.xlu0 %605, %v576
      %v607 = vpop.permute.xlu0 %606
      %610 = vset.pattern.permute.xlu0 0
      %611 = vperm.xlu0 %610, %v577
      %v612 = vpop.permute.xlu0 %611
      %615 = vset.pattern.permute.xlu0 0
      %616 = vperm.xlu0 %615, %v578
      %v617 = vpop.permute.xlu0 %616
      %vm619 = vcmask 64512
      %v621 = vsel %vm619, %v563, 0
      %v624 = vsel %vm619, %v564, 0
      %v627 = vsel %vm619, %v565, 0
      %v630 = vsel %vm619, %v566, 0
      %v633 = vsel %vm619, %v567, 0
      %v636 = vsel %vm619, %v568, 0
      %v639 = vsel %vm619, %v569, 0
      %v642 = vsel %vm619, %v570, 0
      %644 = vmatprep.subr.mxu0 0.0
      %645 = vmatpush1.msra.mxu0 %v562
      %646 = vmatprep.subr.mxu0 0.0
      %647 = vmatpush1.msra.mxu0 0.0
      %648 = vmatprep.subr.mxu0 0.0
      %649 = vmatpush1.msra.mxu0 0.0
      %650 = vmatprep.subr.mxu0 0.0
      %651 = vmatpush1.msra.mxu0 0.0
      %652 = vmatprep.subr.mxu0 0.0
      %653 = vmatpush1.msra.mxu0 0.0
      %654 = vmatprep.subr.mxu0 0.0
      %655 = vmatpush1.msra.mxu0 0.0
      %656 = vmatprep.subr.mxu0 0.0
      %657 = vmatpush1.msra.mxu0 0.0
      %658 = vmatprep.subr.mxu0 0.0
      %659 = vmatpush1.msra.mxu0 0.0
      %660 = vmatprep.subr.mxu0 0.0
      %661 = vmatpush1.msra.mxu0 0.0
      %662 = vmatprep.subr.mxu0 0.0
      %663 = vmatpush1.msra.mxu0 0.0
      %664 = vmatprep.subr.mxu0 0.0
      %665 = vmatpush1.msra.mxu0 0.0
      %666 = vmatprep.subr.mxu0 0.0
      %667 = vmatpush1.msra.mxu0 0.0
      %668 = vmatprep.subr.mxu0 0.0
      %669 = vmatpush1.msra.mxu0 0.0
      %670 = vmatprep.subr.mxu0 0.0
      %671 = vmatpush1.msra.mxu0 0.0
      %672 = vmatprep.subr.mxu0 0.0
      %673 = vmatpush1.msra.mxu0 0.0
      %674 = vmatprep.subr.mxu0 0.0
      %675 = vmatpush1.msra.mxu0 0.0
      %676 = vmatprep.subr.mxu0 0.0
      %677 = vmatpush1.msra.mxu0 0.0
      %678 = vmatprep.subr.mxu0 0.0
      %679 = vmatpush1.msra.mxu0 0.0
      %680 = vmatprep.subr.mxu0 0.0
      %681 = vmatpush1.msra.mxu0 0.0
      %682 = vmatprep.subr.mxu0 0.0
      %683 = vmatpush1.msra.mxu0 0.0
      %684 = vmatprep.subr.mxu0 0.0
      %685 = vmatpush1.msra.mxu0 0.0
      %686 = vmatprep.subr.mxu0 0.0
      %687 = vmatpush1.msra.mxu0 0.0
      %688 = vmatprep.subr.mxu0 0.0
      %689 = vmatpush1.msra.mxu0 0.0
      %690 = vmatprep.subr.mxu0 0.0
      %691 = vmatpush1.msra.mxu0 0.0
      %692 = vmatprep.subr.mxu0 0.0
      %693 = vmatpush1.msra.mxu0 0.0
      %694 = vmatprep.subr.mxu0 0.0
      %695 = vmatpush1.msra.mxu0 0.0
      %696 = vmatprep.subr.mxu0 0.0
      %697 = vmatpush1.msra.mxu0 0.0
      %698 = vmatprep.subr.mxu0 0.0
      %699 = vmatpush1.msra.mxu0 0.0
      %700 = vmatprep.subr.mxu0 0.0
      %701 = vmatpush1.msra.mxu0 0.0
      %702 = vmatprep.subr.mxu0 0.0
      %703 = vmatpush1.msra.mxu0 0.0
      %704 = vmatprep.subr.mxu0 0.0
      %705 = vmatpush1.msra.mxu0 0.0
      %706 = vmatprep.subr.mxu0 0.0
      %707 = vmatpush1.msra.mxu0 0.0
      %708 = vmatprep.mubr.f32.mxu0 0.0
      %709 = vmatmul.mubr.f32.gmra.mrb[0].mxu0 %v621
      %v710 = vpop.f32.mrb[0].mxu0
      %v711 = vadd.f32 %v582, %v710
      %v712 = vpop.f32.mrb[0].mxu0
      %713 = vmatprep.mubr.f32.mxu0 0.0
      %714 = vmatmul.mubr.f32.gmra.mrb[0].mxu0 %v624
      %v715 = vpop.f32.mrb[0].mxu0
      %v716 = vadd.f32 %v587, %v715
      %v717 = vpop.f32.mrb[0].mxu0
      %718 = vmatprep.mubr.f32.mxu0 0.0
      %719 = vmatmul.mubr.f32.gmra.mrb[0].mxu0 %v627
      %v720 = vpop.f32.mrb[0].mxu0
      %v721 = vadd.f32 %v592, %v720
      %v722 = vpop.f32.mrb[0].mxu0
      %723 = vmatprep.mubr.f32.mxu0 0.0
      %724 = vmatmul.mubr.f32.gmra.mrb[0].mxu0 %v630
      %v725 = vpop.f32.mrb[0].mxu0
      %v726 = vadd.f32 %v597, %v725
      %v727 = vpop.f32.mrb[0].mxu0
      %728 = vmatprep.mubr.f32.mxu0 0.0
      %729 = vmatmul.mubr.f32.gmra.mrb[0].mxu0 %v633
      %v730 = vpop.f32.mrb[0].mxu0
      %v731 = vadd.f32 %v602, %v730
      %v732 = vpop.f32.mrb[0].mxu0
      %733 = vmatprep.mubr.f32.mxu0 0.0
      %734 = vmatmul.mubr.f32.gmra.mrb[0].mxu0 %v636
      %v735 = vpop.f32.mrb[0].mxu0
      %v736 = vadd.f32 %v607, %v735
      %v737 = vpop.f32.mrb[0].mxu0
      %738 = vmatprep.mubr.f32.mxu0 0.0
      %739 = vmatmul.mubr.f32.gmra.mrb[0].mxu0 %v639
      %v740 = vpop.f32.mrb[0].mxu0
      %v741 = vadd.f32 %v612, %v740
      %v742 = vpop.f32.mrb[0].mxu0
      %743 = vmatprep.mubr.f32.mxu0 0.0
      %744 = vmatmul.mubr.f32.gmra.mrb[0].mxu0 %v642
      %v745 = vpop.f32.mrb[0].mxu0
      %v746 = vadd.f32 %v617, %v745
      %v747 = vpop.f32.mrb[0].mxu0
      %748 = vdwg.mxu0
      %v749 = vld [vmem:[%s7] sm:$0xff]
      %v750 = vld [vmem:[%s7 + $0x8] sm:$0xff]
      %v751 = vld [vmem:[%s7 + $0x10] sm:$0xff]
      %v752 = vld [vmem:[%s7 + $0x18] sm:$0xff]
      %v753 = vld [vmem:[%s7 + $0x20] sm:$0xff]
      %v754 = vld [vmem:[%s7 + $0x28] sm:$0xff]
      %v755 = vld [vmem:[%s7 + $0x30] sm:$0xff]
      %v756 = vld [vmem:[%s7 + $0x38] sm:$0xff]
      %v757 = vld [vmem:[%s8] sm:$0xff]
      %v758 = vld [vmem:[%s8 + $0x8] sm:$0xff]
      %v759 = vld [vmem:[%s8 + $0x10] sm:$0xff]
      %v760 = vld [vmem:[%s8 + $0x18] sm:$0xff]
      %v761 = vld [vmem:[%s8 + $0x20] sm:$0xff]
      %v762 = vld [vmem:[%s8 + $0x28] sm:$0xff]
      %v763 = vld [vmem:[%s8 + $0x30] sm:$0xff]
      %v764 = vld [vmem:[%s8 + $0x38] sm:$0xff]
      %v765 = vadd.f32 %v711, %v716
      %v766 = vadd.f32 %v765, %v721
      %v767 = vadd.f32 %v766, %v726
      %v768 = vadd.f32 %v767, %v731
      %v769 = vadd.f32 %v768, %v736
      %v770 = vadd.f32 %v769, %v741
      %v771 = vadd.f32 %v770, %v746
      %772 = vadd.xlane.f32.xlu0 %v771
      %v773 = vpop.xlane.xlu0 %772
      %v774 = vrot.slane %v773, 4
      %v775 = vadd.f32 %v773, %v774
      %v776 = vrot.slane %v775, 2
      %v777 = vadd.f32 %v775, %v776
      %v778 = vrot.slane %v777, 1
      %v779 = vadd.f32 %v777, %v778
      %s780 = vtos %v779
      %v781 = vrcp.pop 8192.0
      %s782 = vtos %v781
      %s783 = smul.f32 %s780, %s782
      %v784 = vstv %s783
      %v785 = vsub.f32 %v711, %v784
      %v786 = vsub.f32 %v716, %v784
      %v787 = vsub.f32 %v721, %v784
      %v788 = vsub.f32 %v726, %v784
      %v789 = vsub.f32 %v731, %v784
      %v790 = vsub.f32 %v736, %v784
      %v791 = vsub.f32 %v741, %v784
      %v792 = vsub.f32 %v746, %v784
      %v793 = vmul.f32 %v785, %v785
      %v794 = vmul.f32 %v786, %v786
      %v795 = vmul.f32 %v787, %v787
      %v796 = vmul.f32 %v788, %v788
      %v797 = vmul.f32 %v789, %v789
      %v798 = vmul.f32 %v790, %v790
      %v799 = vmul.f32 %v791, %v791
      %v800 = vmul.f32 %v792, %v792
      %v801 = vadd.f32 %v793, %v794
      %v802 = vadd.f32 %v801, %v795
      %v803 = vadd.f32 %v802, %v796
      %v804 = vadd.f32 %v803, %v797
      %v805 = vadd.f32 %v804, %v798
      %v806 = vadd.f32 %v805, %v799
      %v807 = vadd.f32 %v806, %v800
      %808 = vadd.xlane.f32.xlu0 %v807
      %v809 = vpop.xlane.xlu0 %808
      %v810 = vrot.slane %v809, 4
      %v811 = vadd.f32 %v809, %v810
      %v812 = vrot.slane %v811, 2
      %v813 = vadd.f32 %v811, %v812
      %v814 = vrot.slane %v813, 1
      %v815 = vadd.f32 %v813, %v814
      %s816 = vtos %v815
      %v817 = vrcp.pop 8192.0
      %s818 = vtos %v817
      %s819 = smul.f32 %s816, %s818
      %s820 = sadd.f32 %s819, 1e-05
      %v821 = vstv %s820
      %v822 = vrsqrt.pop %v821
      %s823 = vtos %v822
      %v824 = vstv %s823
      %v825 = vmul.f32 %v785, %v824
      %v826 = vmul.f32 %v786, %v824
      %v827 = vmul.f32 %v787, %v824
      %v828 = vmul.f32 %v788, %v824
      %v829 = vmul.f32 %v789, %v824
      %v830 = vmul.f32 %v790, %v824
      %v831 = vmul.f32 %v791, %v824
      %v832 = vmul.f32 %v792, %v824
      %834 = vset.pattern.permute.xlu0 0
      %835 = vperm.xlu0 %834, %v749
      %v836 = vpop.permute.xlu0 %835
      %839 = vset.pattern.permute.xlu0 0
      %840 = vperm.xlu0 %839, %v750
      %v841 = vpop.permute.xlu0 %840
      %844 = vset.pattern.permute.xlu0 0
      %845 = vperm.xlu0 %844, %v751
      %v846 = vpop.permute.xlu0 %845
      %849 = vset.pattern.permute.xlu0 0
      %850 = vperm.xlu0 %849, %v752
      %v851 = vpop.permute.xlu0 %850
      %854 = vset.pattern.permute.xlu0 0
      %855 = vperm.xlu0 %854, %v753
      %v856 = vpop.permute.xlu0 %855
      %859 = vset.pattern.permute.xlu0 0
      %860 = vperm.xlu0 %859, %v754
      %v861 = vpop.permute.xlu0 %860
      %864 = vset.pattern.permute.xlu0 0
      %865 = vperm.xlu0 %864, %v755
      %v866 = vpop.permute.xlu0 %865
      %869 = vset.pattern.permute.xlu0 0
      %870 = vperm.xlu0 %869, %v756
      %v871 = vpop.permute.xlu0 %870
      %v873 = vmul.f32 %v825, %v836
      %v874 = vmul.f32 %v826, %v841
      %v875 = vmul.f32 %v827, %v846
      %v876 = vmul.f32 %v828, %v851
      %v877 = vmul.f32 %v829, %v856
      %v878 = vmul.f32 %v830, %v861
      %v879 = vmul.f32 %v831, %v866
      %v880 = vmul.f32 %v832, %v871
      %882 = vset.pattern.permute.xlu0 0
      %883 = vperm.xlu0 %882, %v757
      %v884 = vpop.permute.xlu0 %883
      %887 = vset.pattern.permute.xlu0 0
      %888 = vperm.xlu0 %887, %v758
      %v889 = vpop.permute.xlu0 %888
      %892 = vset.pattern.permute.xlu0 0
      %893 = vperm.xlu0 %892, %v759
      %v894 = vpop.permute.xlu0 %893
      %897 = vset.pattern.permute.xlu0 0
      %898 = vperm.xlu0 %897, %v760
      %v899 = vpop.permute.xlu0 %898
      %902 = vset.pattern.permute.xlu0 0
      %903 = vperm.xlu0 %902, %v761
      %v904 = vpop.permute.xlu0 %903
      %907 = vset.pattern.permute.xlu0 0
      %908 = vperm.xlu0 %907, %v762
      %v909 = vpop.permute.xlu0 %908
      %912 = vset.pattern.permute.xlu0 0
      %913 = vperm.xlu0 %912, %v763
      %v914 = vpop.permute.xlu0 %913
      %917 = vset.pattern.permute.xlu0 0
      %918 = vperm.xlu0 %917, %v764
      %v919 = vpop.permute.xlu0 %918
      %v921 = vadd.f32 %v873, %v884
      %v922 = vadd.f32 %v874, %v889
      %v923 = vadd.f32 %v875, %v894
      %v924 = vadd.f32 %v876, %v899
      %v925 = vadd.f32 %v877, %v904
      %v926 = vadd.f32 %v878, %v909
      %v927 = vadd.f32 %v879, %v914
      %v928 = vadd.f32 %v880, %v919
      %v929 = vsub.f32 0.0, %v925
      %v930 = vsub.f32 0.0, %v926
      %v931 = vsub.f32 0.0, %v927
      %v932 = vsub.f32 0.0, %v928
      %v933 = vmul.f32 %v929, 1.442695
      %v934 = vpow.pop %v933
      %v935 = vmul.f32 %v930, 1.442695
      %v936 = vpow.pop %v935
      %v937 = vmul.f32 %v931, 1.442695
      %v938 = vpow.pop %v937
      %v939 = vmul.f32 %v932, 1.442695
      %v940 = vpow.pop %v939
      %v941 = vadd.f32 %v934, 1.0
      %v942 = vadd.f32 %v936, 1.0
      %v943 = vadd.f32 %v938, 1.0
      %v944 = vadd.f32 %v940, 1.0
      %v945 = vrcp.pop %v941
      %v946 = vmul.f32 1.0, %v945
      %v947 = vrcp.pop %v942
      %v948 = vmul.f32 1.0, %v947
      %v949 = vrcp.pop %v943
      %v950 = vmul.f32 1.0, %v949
      %v951 = vrcp.pop %v944
      %v952 = vmul.f32 1.0, %v951
      %v953 = vmul.f32 %v921, %v946
      %v954 = vmul.f32 %v922, %v948
      %v955 = vmul.f32 %v923, %v950
      %v956 = vmul.f32 %v924, %v952
      %v957 = vld [vmem:[%s9] sm:$0xff]
      %v958 = vld [vmem:[%s9 + $0x8] sm:$0xff]
      %v959 = vld [vmem:[%s9 + $0x10] sm:$0xff]
      %v960 = vld [vmem:[%s9 + $0x18] sm:$0xff]
      %962 = vset.pattern.permute.xlu0 0
      %963 = vperm.xlu0 %962, %v957
      %v964 = vpop.permute.xlu0 %963
      %967 = vset.pattern.permute.xlu0 0
      %968 = vperm.xlu0 %967, %v958
      %v969 = vpop.permute.xlu0 %968
      %972 = vset.pattern.permute.xlu0 0
      %973 = vperm.xlu0 %972, %v959
      %v974 = vpop.permute.xlu0 %973
      %977 = vset.pattern.permute.xlu0 0
      %978 = vperm.xlu0 %977, %v960
      %v979 = vpop.permute.xlu0 %978
      %v981 = vmul.f32 %v964, %v953
      %v982 = vmul.f32 %v969, %v954
      %v983 = vmul.f32 %v974, %v955
      %v984 = vmul.f32 %v979, %v956
      %989 = vrot.lane.b32.xlu0 %v981, 1
      %v990 = vpop.permute.xlu0 %989
      %991 = vrot.lane.b32.xlu0 %v982, 1
      %v992 = vpop.permute.xlu0 %991
      %993 = vrot.lane.b32.xlu0 %v983, 1
      %v994 = vpop.permute.xlu0 %993
      %995 = vrot.lane.b32.xlu0 %v984, 1
      %v996 = vpop.permute.xlu0 %995
      %v1001 = vadd.f32 %v360, %v990
      %v1002 = vadd.f32 %v364, %v990
      %v1003 = vadd.f32 %v361, %v992
      %v1004 = vadd.f32 %v365, %v992
      %v1005 = vadd.f32 %v362, %v994
      %v1006 = vadd.f32 %v366, %v994
      %v1007 = vadd.f32 %v363, %v996
      %v1008 = vadd.f32 %v367, %v996
      %1017 = vrot.lane.b32.xlu0 %v1001, 127
      %v1018 = vpop.permute.xlu0 %1017
      %1019 = vrot.lane.b32.xlu0 %v1002, 127
      %v1020 = vpop.permute.xlu0 %1019
      %1021 = vrot.lane.b32.xlu0 %v1003, 127
      %v1022 = vpop.permute.xlu0 %1021
      %1023 = vrot.lane.b32.xlu0 %v1004, 127
      %v1024 = vpop.permute.xlu0 %1023
      %1025 = vrot.lane.b32.xlu0 %v1005, 127
      %v1026 = vpop.permute.xlu0 %1025
      %1027 = vrot.lane.b32.xlu0 %v1006, 127
      %v1028 = vpop.permute.xlu0 %1027
      %1029 = vrot.lane.b32.xlu0 %v1007, 127
      %v1030 = vpop.permute.xlu0 %1029
      %1031 = vrot.lane.b32.xlu0 %v1008, 127
      %v1032 = vpop.permute.xlu0 %1031
      %v1033 = vsel %vm392, %v1018, %v1020
      %v1034 = vsel %vm392, %v1022, %v1024
      %v1035 = vsel %vm392, %v1026, %v1028
      %v1036 = vsel %vm392, %v1030, %v1032
      %1041 = vst [vmem:[%s359] sm:$0xff] %v1033
      %1042 = vst [vmem:[%s359 + $0x8] sm:$0xff] %v1034
      %1043 = vst [vmem:[%s359 + $0x10] sm:$0xff] %v1035
      %1044 = vst [vmem:[%s359 + $0x18] sm:$0xff] %v1036
      %p1045 = scmp.lt.s32.totalorder %s21, 1
      %s1046 = scalar_select %p1045, %s21, 1
      %s1047 = smul.addr %s1046, 4
      %s1048 = smul.addr %s1047, 8
      %s1049 = scalar_lea.vmem %s10, %s1048
      // Predicated region
      $region61: #{dconv_forward.2} parent=59 // pred_check
        %p1050 = pneg %p254
      $region62: #{dconv_forward.2} parent=59 // pred_check_branch
        %1052 = sbr.rel (%p1050) target = $region64
      $region63: #{dconv_forward.2} parent=59 // pred_region
        _
      $region64: #{dconv_forward.2} parent=59 // pred_fallthru
        _
    $region60: #{dconv_forward.2} parent=5 // pred_fallthru
      _
    %p1053 = scmp.le.s32.totalorder 2, %s16
    // Predicated region
    $region65: #{dconv_forward.2} parent=5 // pred_check
      %p1054 = pneg %p1053
    $region66: #{dconv_forward.2} parent=5 // pred_check_branch
      %1056 = sbr.rel (%p1054) target = $region68
    $region67: #{dconv_forward.2} parent=5 // pred_region
      %s1057 = ssub.s32 %s16, 2
      // Predicated region
      $region69: #{dconv_forward.2} parent=67 // pred_check
        %p1058 = pneg %p260
      $region70: #{dconv_forward.2} parent=67 // pred_check_branch
        %1060 = sbr.rel (%p1058) target = $region72
      $region71: #{dconv_forward.2} parent=67 // pred_region
        %p1061 = scmp.lt.s32.totalorder %s22, 1
        %s1062 = scalar_select %p1061, %s22, 1
        %s1063 = smul.addr %s1062, 4
        %s1064 = smul.addr %s1063, 8
        %s1065 = scalar_lea.vmem %s10, %s1064
      $region72: #{dconv_forward.2} parent=67 // pred_fallthru
        _
    $region68: #{dconv_forward.2} parent=5 // pred_fallthru
      _
  $region6: #{dconv_forward.2} parent=0 // loop_footer
    %s20 = sadd.s32 1, %s16
  $region7: #{dconv_forward.2} parent=0 // loop_footer_branch
    %15 = sbr.rel target = $region3
  $region8: #{dconv_forward.2} parent=0 // loop_exit
    _

// kernel: dconv_forward.3
$region0: #{dconv_forward.3}
  #allocation0 [shape = 'u32[]', space=smem, size = 0x4, offset = 0x4, fixed_abs, tag = 'smem constant byte address 0x4 - core index']
  #allocation1 [shape = 'u32[144,128]{1,0:T(1,128)}', space=vmem, size = 0x12000, scoped, tag = 'internal scratch']
  %s0 = inlined_call_operand.vmem [shape: f32[2,32,132], index: 0, kind: input, shape index: {}]
  %s1 = inlined_call_operand.vmem [shape: f32[8,96], index: 1, kind: input, shape index: {}]
  %s2 = inlined_call_operand.vmem [shape: f32[8,1], index: 2, kind: input, shape index: {}]
  %s3 = inlined_call_operand.vmem [shape: f32[8,1], index: 3, kind: input, shape index: {}]
  %s4 = inlined_call_operand.vmem [shape: f32[8,1], index: 4, kind: input, shape index: {}]
  %s5 = inlined_call_operand.vmem [shape: f32[64,8], index: 5, kind: input, shape index: {}]
  %s6 = inlined_call_operand.vmem [shape: f32[64,1], index: 6, kind: input, shape index: {}]
  %s7 = inlined_call_operand.vmem [shape: f32[64,1], index: 7, kind: input, shape index: {}]
  %s8 = inlined_call_operand.vmem [shape: f32[64,1], index: 8, kind: input, shape index: {}]
  %s9 = inlined_call_operand.vmem [shape: f32[32,1], index: 9, kind: input, shape index: {}]
  %s10 = inlined_call_operand.hbm [shape: f32[2,32,128], index: 10, kind: output, shape index: {}]
  %s11 = sld [smem:[#allocation0]]
  $region73: #{dconv_forward.3} parent=0
    _
  %s13 = ssub.s32 1, %s11
  %s14 = scalar_select 0, %s13, %s11
  $region1: #{dconv_forward.3} parent=0
    #allocation2 [shape = 'u8[32768]{0}', space=vmem, size = 0x8000, scoped, tag = 'output window, operand 0']
    #allocation3 [shape = 's32[2]{0}', space=sflag, size = 0x8, scoped, tag = 'scoped memory for dconv_forward.3']
    %15 = vsyncpa [#allocation3], 0
    %s16 = scalar_lea.sflag [#allocation3], 1
    %17 = vsyncpa %s16, 0
    loop: start=0, step=1, limit=4
    $region2: #{dconv_forward.3} parent=1 // loop_pre_header
      _
    $region3: #{dconv_forward.3} parent=1 // loop_header
      %s19 = sphi 0, %s23
      %p20 = scmp.ge.s32.totalorder %s19, 4
      %s29 = sphi 0, %s31
      %s32 = sphi 0, %s29
      %s33 = sphi 0, %s32
      %s49 = sphi 0, %s33
      %s53 = sphi 0, %s53
      %s55 = sphi 0, %s53
      %s56 = sphi 0, %s55
      %s70 = sphi 0, %s56
      %s74 = sphi 0, %s74
      %s76 = sphi 0, %s74
      %s77 = sphi 0, %s76
      %s91 = sphi 0, %s77
      %s95 = sphi 0, %s95
      %s97 = sphi 0, %s95
      %s98 = sphi 0, %s97
      %s112 = sphi 0, %s98
      %s116 = sphi 0, %s116
      %s118 = sphi 0, %s116
      %s119 = sphi 0, %s118
      %s133 = sphi 0, %s119
      %s137 = sphi 0, %s137
      %s139 = sphi 0, %s137
      %s140 = sphi 0, %s139
      %s154 = sphi 0, %s140
      %s158 = sphi 0, %s158
      %s160 = sphi 0, %s158
      %s161 = sphi 0, %s160
      %s175 = sphi 0, %s161
      %s179 = sphi 0, %s179
      %s181 = sphi 0, %s179
      %s182 = sphi 0, %s181
      %s196 = sphi 0, %s182
      %s200 = sphi 0, %s200
      %s202 = sphi 0, %s200
      %s203 = sphi 0, %s202
      %s217 = sphi 0, %s203
      %s221 = sphi 0, %s221
      %s223 = sphi 0, %s221
      %s224 = sphi 0, %s223
      %s238 = sphi 0, %s224
      %s244 = sphi 0, %s246
      %s247 = sphi 0, %s244
      %s248 = sphi 0, %s247
      %s264 = sphi 0, %s248
    $region4: #{dconv_forward.3} parent=1 // loop_header_branch
      %22 = sbr.rel (%p20) target = $region8
    $region5: #{dconv_forward.3} parent=1 // loop_body
      %s24 = ssub.s32 %s19, 1
      %s25 = ssub.s32 %s19, 2
      %s26 = sadd.s32 %s19, 1
      %s27 = ssub.s32 %s19, %s26
      %p28 = scmp.eq.s32.totalorder %s27, 0
      %s30 = sadd.s32 %s29, 1
      %s31 = scalar_select %p28, %s29, %s30
      %p34 = pneg %p28
      %p35 = scmp.eq.s32.totalorder %s19, 1
      %p36 = por %p34, %p35
      %p37 = scmp.ne.s32.totalorder %s29, %s32
      %p38 = scmp.eq.s32.totalorder %s19, 0
      %p39 = por %p37, %p38
      %p40 = scmp.ne.s32.totalorder %s29, %s32
      %p41 = scmp.eq.s32.totalorder %s24, 1
      %p42 = por %p40, %p41
      %p43 = scmp.ne.s32.totalorder %s32, %s33
      %p44 = scmp.eq.s32.totalorder %s24, 0
      %p45 = por %p43, %p44
      %p46 = scmp.ne.s32.totalorder %s32, %s33
      %p47 = scmp.eq.s32.totalorder %s25, 1
      %p48 = por %p46, %p47
      %p50 = scmp.ne.s32.totalorder %s33, %s49
      %p51 = scmp.eq.s32.totalorder %s25, 0
      %p52 = por %p50, %p51
      %s54 = sadd.s32 %s53, 1
      %p57 = scmp.eq.s32.totalorder %s19, 1
      %p58 = scmp.ne.s32.totalorder %s53, %s55
      %p59 = scmp.eq.s32.totalorder %s19, 0
      %p60 = por %p58, %p59
      %p61 = scmp.ne.s32.totalorder %s53, %s55
      %p62 = scmp.eq.s32.totalorder %s24, 1
      %p63 = por %p61, %p62
      %p64 = scmp.ne.s32.totalorder %s55, %s56
      %p65 = scmp.eq.s32.totalorder %s24, 0
      %p66 = por %p64, %p65
      %p67 = scmp.ne.s32.totalorder %s55, %s56
      %p68 = scmp.eq.s32.totalorder %s25, 1
      %p69 = por %p67, %p68
      %p71 = scmp.ne.s32.totalorder %s56, %s70
      %p72 = scmp.eq.s32.totalorder %s25, 0
      %p73 = por %p71, %p72
      %s75 = sadd.s32 %s74, 1
      %p78 = scmp.eq.s32.totalorder %s19, 1
      %p79 = scmp.ne.s32.totalorder %s74, %s76
      %p80 = scmp.eq.s32.totalorder %s19, 0
      %p81 = por %p79, %p80
      %p82 = scmp.ne.s32.totalorder %s74, %s76
      %p83 = scmp.eq.s32.totalorder %s24, 1
      %p84 = por %p82, %p83
      %p85 = scmp.ne.s32.totalorder %s76, %s77
      %p86 = scmp.eq.s32.totalorder %s24, 0
      %p87 = por %p85, %p86
      %p88 = scmp.ne.s32.totalorder %s76, %s77
      %p89 = scmp.eq.s32.totalorder %s25, 1
      %p90 = por %p88, %p89
      %p92 = scmp.ne.s32.totalorder %s77, %s91
      %p93 = scmp.eq.s32.totalorder %s25, 0
      %p94 = por %p92, %p93
      %s96 = sadd.s32 %s95, 1
      %p99 = scmp.eq.s32.totalorder %s19, 1
      %p100 = scmp.ne.s32.totalorder %s95, %s97
      %p101 = scmp.eq.s32.totalorder %s19, 0
      %p102 = por %p100, %p101
      %p103 = scmp.ne.s32.totalorder %s95, %s97
      %p104 = scmp.eq.s32.totalorder %s24, 1
      %p105 = por %p103, %p104
      %p106 = scmp.ne.s32.totalorder %s97, %s98
      %p107 = scmp.eq.s32.totalorder %s24, 0
      %p108 = por %p106, %p107
      %p109 = scmp.ne.s32.totalorder %s97, %s98
      %p110 = scmp.eq.s32.totalorder %s25, 1
      %p111 = por %p109, %p110
      %p113 = scmp.ne.s32.totalorder %s98, %s112
      %p114 = scmp.eq.s32.totalorder %s25, 0
      %p115 = por %p113, %p114
      %s117 = sadd.s32 %s116, 1
      %p120 = scmp.eq.s32.totalorder %s19, 1
      %p121 = scmp.ne.s32.totalorder %s116, %s118
      %p122 = scmp.eq.s32.totalorder %s19, 0
      %p123 = por %p121, %p122
      %p124 = scmp.ne.s32.totalorder %s116, %s118
      %p125 = scmp.eq.s32.totalorder %s24, 1
      %p126 = por %p124, %p125
      %p127 = scmp.ne.s32.totalorder %s118, %s119
      %p128 = scmp.eq.s32.totalorder %s24, 0
      %p129 = por %p127, %p128
      %p130 = scmp.ne.s32.totalorder %s118, %s119
      %p131 = scmp.eq.s32.totalorder %s25, 1
      %p132 = por %p130, %p131
      %p134 = scmp.ne.s32.totalorder %s119, %s133
      %p135 = scmp.eq.s32.totalorder %s25, 0
      %p136 = por %p134, %p135
      %s138 = sadd.s32 %s137, 1
      %p141 = scmp.eq.s32.totalorder %s19, 1
      %p142 = scmp.ne.s32.totalorder %s137, %s139
      %p143 = scmp.eq.s32.totalorder %s19, 0
      %p144 = por %p142, %p143
      %p145 = scmp.ne.s32.totalorder %s137, %s139
      %p146 = scmp.eq.s32.totalorder %s24, 1
      %p147 = por %p145, %p146
      %p148 = scmp.ne.s32.totalorder %s139, %s140
      %p149 = scmp.eq.s32.totalorder %s24, 0
      %p150 = por %p148, %p149
      %p151 = scmp.ne.s32.totalorder %s139, %s140
      %p152 = scmp.eq.s32.totalorder %s25, 1
      %p153 = por %p151, %p152
      %p155 = scmp.ne.s32.totalorder %s140, %s154
      %p156 = scmp.eq.s32.totalorder %s25, 0
      %p157 = por %p155, %p156
      %s159 = sadd.s32 %s158, 1
      %p162 = scmp.eq.s32.totalorder %s19, 1
      %p163 = scmp.ne.s32.totalorder %s158, %s160
      %p164 = scmp.eq.s32.totalorder %s19, 0
      %p165 = por %p163, %p164
      %p166 = scmp.ne.s32.totalorder %s158, %s160
      %p167 = scmp.eq.s32.totalorder %s24, 1
      %p168 = por %p166, %p167
      %p169 = scmp.ne.s32.totalorder %s160, %s161
      %p170 = scmp.eq.s32.totalorder %s24, 0
      %p171 = por %p169, %p170
      %p172 = scmp.ne.s32.totalorder %s160, %s161
      %p173 = scmp.eq.s32.totalorder %s25, 1
      %p174 = por %p172, %p173
      %p176 = scmp.ne.s32.totalorder %s161, %s175
      %p177 = scmp.eq.s32.totalorder %s25, 0
      %p178 = por %p176, %p177
      %s180 = sadd.s32 %s179, 1
      %p183 = scmp.eq.s32.totalorder %s19, 1
      %p184 = scmp.ne.s32.totalorder %s179, %s181
      %p185 = scmp.eq.s32.totalorder %s19, 0
      %p186 = por %p184, %p185
      %p187 = scmp.ne.s32.totalorder %s179, %s181
      %p188 = scmp.eq.s32.totalorder %s24, 1
      %p189 = por %p187, %p188
      %p190 = scmp.ne.s32.totalorder %s181, %s182
      %p191 = scmp.eq.s32.totalorder %s24, 0
      %p192 = por %p190, %p191
      %p193 = scmp.ne.s32.totalorder %s181, %s182
      %p194 = scmp.eq.s32.totalorder %s25, 1
      %p195 = por %p193, %p194
      %p197 = scmp.ne.s32.totalorder %s182, %s196
      %p198 = scmp.eq.s32.totalorder %s25, 0
      %p199 = por %p197, %p198
      %s201 = sadd.s32 %s200, 1
      %p204 = scmp.eq.s32.totalorder %s19, 1
      %p205 = scmp.ne.s32.totalorder %s200, %s202
      %p206 = scmp.eq.s32.totalorder %s19, 0
      %p207 = por %p205, %p206
      %p208 = scmp.ne.s32.totalorder %s200, %s202
      %p209 = scmp.eq.s32.totalorder %s24, 1
      %p210 = por %p208, %p209
      %p211 = scmp.ne.s32.totalorder %s202, %s203
      %p212 = scmp.eq.s32.totalorder %s24, 0
      %p213 = por %p211, %p212
      %p214 = scmp.ne.s32.totalorder %s202, %s203
      %p215 = scmp.eq.s32.totalorder %s25, 1
      %p216 = por %p214, %p215
      %p218 = scmp.ne.s32.totalorder %s203, %s217
      %p219 = scmp.eq.s32.totalorder %s25, 0
      %p220 = por %p218, %p219
      %s222 = sadd.s32 %s221, 1
      %p225 = scmp.eq.s32.totalorder %s19, 1
      %p226 = scmp.ne.s32.totalorder %s221, %s223
      %p227 = scmp.eq.s32.totalorder %s19, 0
      %p228 = por %p226, %p227
      %p229 = scmp.ne.s32.totalorder %s221, %s223
      %p230 = scmp.eq.s32.totalorder %s24, 1
      %p231 = por %p229, %p230
      %p232 = scmp.ne.s32.totalorder %s223, %s224
      %p233 = scmp.eq.s32.totalorder %s24, 0
      %p234 = por %p232, %p233
      %p235 = scmp.ne.s32.totalorder %s223, %s224
      %p236 = scmp.eq.s32.totalorder %s25, 1
      %p237 = por %p235, %p236
      %p239 = scmp.ne.s32.totalorder %s224, %s238
      %p240 = scmp.eq.s32.totalorder %s25, 0
      %p241 = por %p239, %p240
      %s242 = ssub.s32 %s19, %s26
      %p243 = scmp.eq.s32.totalorder %s242, 0
      %s245 = sadd.s32 %s244, 1
      %s246 = scalar_select %p243, %s244, %s245
      %p249 = pneg %p243
      %p250 = scmp.eq.s32.totalorder %s19, 1
      %p251 = por %p249, %p250
      %p252 = scmp.ne.s32.totalorder %s244, %s247
      %p253 = scmp.eq.s32.totalorder %s19, 0
      %p254 = por %p252, %p253
      %p255 = scmp.ne.s32.totalorder %s244, %s247
      %p256 = scmp.eq.s32.totalorder %s24, 1
      %p257 = por %p255, %p256
      %p258 = scmp.ne.s32.totalorder %s247, %s248
      %p259 = scmp.eq.s32.totalorder %s24, 0
      %p260 = por %p258, %p259
      %p261 = scmp.ne.s32.totalorder %s247, %s248
      %p262 = scmp.eq.s32.totalorder %s25, 1
      %p263 = por %p261, %p262
      %p265 = scmp.ne.s32.totalorder %s248, %s264
      %p266 = scmp.eq.s32.totalorder %s25, 0
      %p267 = por %p265, %p266
      %p268 = scmp.le.s32.totalorder 1, %s19
      %p269 = scmp.lt.s32.totalorder %s19, 3
      %p270 = pnand %p268, %p269
      %p271 = pneg %p270
      // Predicated region
      $region9: #{dconv_forward.3} parent=5 // pred_check
        _
      $region10: #{dconv_forward.3} parent=5 // pred_check_branch
        %273 = sbr.rel (%p270) target = $region12
      $region11: #{dconv_forward.3} parent=5 // pred_region
        %s274 = ssub.s32 %s19, 1
        // Predicated region
        $region13: #{dconv_forward.3} parent=11 // pred_check
          %p275 = pneg %p66
        $region14: #{dconv_forward.3} parent=11 // pred_check_branch
          %277 = sbr.rel (%p275) target = $region16
        $region15: #{dconv_forward.3} parent=11 // pred_region
          _
        $region16: #{dconv_forward.3} parent=11 // pred_fallthru
          _
        // Predicated region
        $region17: #{dconv_forward.3} parent=11 // pred_check
          %p278 = pneg %p87
        $region18: #{dconv_forward.3} parent=11 // pred_check_branch
          %280 = sbr.rel (%p278) target = $region20
        $region19: #{dconv_forward.3} parent=11 // pred_region
          _
        $region20: #{dconv_forward.3} parent=11 // pred_fallthru
          _
        // Predicated region
        $region21: #{dconv_forward.3} parent=11 // pred_check
          %p281 = pneg %p108
        $region22: #{dconv_forward.3} parent=11 // pred_check_branch
          %283 = sbr.rel (%p281) target = $region24
        $region23: #{dconv_forward.3} parent=11 // pred_region
          _
        $region24: #{dconv_forward.3} parent=11 // pred_fallthru
          _
        // Predicated region
        $region25: #{dconv_forward.3} parent=11 // pred_check
          %p284 = pneg %p129
        $region26: #{dconv_forward.3} parent=11 // pred_check_branch
          %286 = sbr.rel (%p284) target = $region28
        $region27: #{dconv_forward.3} parent=11 // pred_region
          _
        $region28: #{dconv_forward.3} parent=11 // pred_fallthru
          _
        // Predicated region
        $region29: #{dconv_forward.3} parent=11 // pred_check
          %p287 = pneg %p150
        $region30: #{dconv_forward.3} parent=11 // pred_check_branch
          %289 = sbr.rel (%p287) target = $region32
        $region31: #{dconv_forward.3} parent=11 // pred_region
          _
        $region32: #{dconv_forward.3} parent=11 // pred_fallthru
          _
        // Predicated region
        $region33: #{dconv_forward.3} parent=11 // pred_check
          %p290 = pneg %p171
        $region34: #{dconv_forward.3} parent=11 // pred_check_branch
          %292 = sbr.rel (%p290) target = $region36
        $region35: #{dconv_forward.3} parent=11 // pred_region
          _
        $region36: #{dconv_forward.3} parent=11 // pred_fallthru
          _
        // Predicated region
        $region37: #{dconv_forward.3} parent=11 // pred_check
          %p293 = pneg %p192
        $region38: #{dconv_forward.3} parent=11 // pred_check_branch
          %295 = sbr.rel (%p293) target = $region40
        $region39: #{dconv_forward.3} parent=11 // pred_region
          _
        $region40: #{dconv_forward.3} parent=11 // pred_fallthru
          _
        // Predicated region
        $region41: #{dconv_forward.3} parent=11 // pred_check
          %p296 = pneg %p213
        $region42: #{dconv_forward.3} parent=11 // pred_check_branch
          %298 = sbr.rel (%p296) target = $region44
        $region43: #{dconv_forward.3} parent=11 // pred_region
          _
        $region44: #{dconv_forward.3} parent=11 // pred_fallthru
          _
        // Predicated region
        $region45: #{dconv_forward.3} parent=11 // pred_check
          %p299 = pneg %p234
        $region46: #{dconv_forward.3} parent=11 // pred_check_branch
          %301 = sbr.rel (%p299) target = $region48
        $region47: #{dconv_forward.3} parent=11 // pred_region
          _
        $region48: #{dconv_forward.3} parent=11 // pred_fallthru
          _
      $region12: #{dconv_forward.3} parent=5 // pred_fallthru
        _
      %p302 = scmp.lt.s32.totalorder %s19, 2
      // Predicated region
      $region49: #{dconv_forward.3} parent=5 // pred_check
        %p303 = pneg %p302
      $region50: #{dconv_forward.3} parent=5 // pred_check_branch
        %305 = sbr.rel (%p303) target = $region52
      $region51: #{dconv_forward.3} parent=5 // pred_region
        // Predicated region
        $region53: #{dconv_forward.3} parent=51 // pred_check
          %p306 = pneg %p39
        $region54: #{dconv_forward.3} parent=51 // pred_check_branch
          %308 = sbr.rel (%p306) target = $region56
        $region55: #{dconv_forward.3} parent=51 // pred_region
          %p309 = scmp.lt.s32.totalorder %s19, 1
          %s310 = scalar_select %p309, %s19, 1
          %s311 = smul.addr %s310, 8
          %s312 = smul.addr %s311, 8
          %s313 = scalar_lea.vmem %s0, %s312
        $region56: #{dconv_forward.3} parent=51 // pred_fallthru
          _
      $region52: #{dconv_forward.3} parent=5 // pred_fallthru
        _
      %p314 = scmp.le.s32.totalorder 1, %s19
      %p315 = scmp.lt.s32.totalorder %s19, 3
      %p316 = pnand %p314, %p315
      %p317 = pneg %p316
      // Predicated region
      $region57: #{dconv_forward.3} parent=5 // pred_check
        _
      $region58: #{dconv_forward.3} parent=5 // pred_check_branch
        %319 = sbr.rel (%p316) target = $region60
      $region59: #{dconv_forward.3} parent=5 // pred_region
        %s320 = ssub.s32 %s19, 1
        %p321 = scmp.lt.s32.totalorder %s24, 1
        %s322 = scalar_select %p321, %s24, 1
        %s323 = smul.addr %s322, 8
        %s324 = smul.addr %s323, 8
        %s325 = scalar_lea.vmem %s0, %s324
        %p326 = pneg %p45
        %p327 = pneg %p42
        %p328 = pneg %p66
        %p329 = pneg %p63
        %p330 = pneg %p87
        %p331 = pneg %p84
        %p332 = pneg %p108
        %p333 = pneg %p105
        %p334 = pneg %p129
        %p335 = pneg %p126
        %p336 = pneg %p150
        %p337 = pneg %p147
        %p338 = pneg %p171
        %p339 = pneg %p168
        %p340 = pneg %p192
        %p341 = pneg %p189
        %p342 = pneg %p213
        %p343 = pneg %p210
        %p344 = pneg %p234
        %p345 = pneg %p231
        %p346 = pneg %p260
        %p347 = pneg %p257
        %s348 = sand.u32 %s247, 1
        %s349 = scalar_lea.sflag [#allocation3], %s348
        %s350 = sand.u32 %s247, 1
        %s351 = smul.addr %s350, 32
        %s352 = scalar_lea.vmem [#allocation2], %s351
        %p353 = scmp.lt.s32.totalorder %s24, 1
        %s354 = scalar_select %p353, %s24, 1
        %s355 = smul.addr %s354, 8
        %s356 = smul.addr %s355, 8
        %s357 = scalar_lea.vmem %s0, %s356
        %v358 = vld [vmem:[%s357] sm:$0xff]
        %v359 = vld [vmem:[%s357 + $0x10] sm:$0xff]
        %v360 = vld [vmem:[%s357 + $0x20] sm:$0xff]
        %v361 = vld [vmem:[%s357 + $0x30] sm:$0xff]
        %v362 = vld [vmem:[%s357 + $0x8] sm:$0xff]
        %v363 = vld [vmem:[%s357 + $0x18] sm:$0xff]
        %v364 = vld [vmem:[%s357 + $0x28] sm:$0xff]
        %v365 = vld [vmem:[%s357 + $0x38] sm:$0xff]
        %374 = vrot.lane.b32.xlu0 %v358, 126
        %v375 = vpop.permute.xlu0 %374
        %376 = vrot.lane.b32.xlu0 %v362, 126
        %v377 = vpop.permute.xlu0 %376
        %378 = vrot.lane.b32.xlu0 %v359, 126
        %v379 = vpop.permute.xlu0 %378
        %380 = vrot.lane.b32.xlu0 %v363, 126
        %v381 = vpop.permute.xlu0 %380
        %382 = vrot.lane.b32.xlu0 %v360, 126
        %v383 = vpop.permute.xlu0 %382
        %384 = vrot.lane.b32.xlu0 %v364, 126
        %v385 = vpop.permute.xlu0 %384
        %386 = vrot.lane.b32.xlu0 %v361, 126
        %v387 = vpop.permute.xlu0 %386
        %388 = vrot.lane.b32.xlu0 %v365, 126
        %v389 = vpop.permute.xlu0 %388
        %vm390 = vcmask 1031168
        %v391 = vsel %vm390, %v375, %v377
        %v392 = vsel %vm390, %v379, %v381
        %v393 = vsel %vm390, %v383, %v385
        %v394 = vsel %vm390, %v387, %v389
        %399 = vrot.lane.b32.xlu0 %v358, 124
        %v400 = vpop.permute.xlu0 %399
        %401 = vrot.lane.b32.xlu0 %v362, 124
        %v402 = vpop.permute.xlu0 %401
        %403 = vrot.lane.b32.xlu0 %v359, 124
        %v404 = vpop.permute.xlu0 %403
        %405 = vrot.lane.b32.xlu0 %v363, 124
        %v406 = vpop.permute.xlu0 %405
        %407 = vrot.lane.b32.xlu0 %v360, 124
        %v408 = vpop.permute.xlu0 %407
        %409 = vrot.lane.b32.xlu0 %v364, 124
        %v410 = vpop.permute.xlu0 %409
        %411 = vrot.lane.b32.xlu0 %v361, 124
        %v412 = vpop.permute.xlu0 %411
        %413 = vrot.lane.b32.xlu0 %v365, 124
        %v414 = vpop.permute.xlu0 %413
        %vm415 = vcmask 1014784
        %v416 = vsel %vm415, %v400, %v402
        %v417 = vsel %vm415, %v404, %v406
        %v418 = vsel %vm415, %v408, %v410
        %v419 = vsel %vm415, %v412, %v414
        %v424 = vld [vmem:[%s1] sm:$0xff]
        %v425 = vld [vmem:[%s2] sm:$0xff]
        %427 = vset.pattern.permute.xlu0 0
        %428 = vperm.xlu0 %427, %v425
        %v429 = vpop.permute.xlu0 %428
        %vm431 = vcmask 785408
        %v433 = vsel %vm431, %v424, 0
        %435 = vmatprep.subr.mxu0 0.0
        %436 = vmatpush1.msra.mxu0 %v358
        %437 = vmatprep.subr.mxu0 0.0
        %438 = vmatpush1.msra.mxu0 %v359
        %439 = vmatprep.subr.mxu0 0.0
        %440 = vmatpush1.msra.mxu0 %v360
        %441 = vmatprep.subr.mxu0 0.0
        %442 = vmatpush1.msra.mxu0 %v361
        %443 = vmatprep.subr.mxu0 0.0
        %444 = vmatpush1.msra.mxu0 %v391
        %445 = vmatprep.subr.mxu0 0.0
        %446 = vmatpush1.msra.mxu0 %v392
        %447 = vmatprep.subr.mxu0 0.0
        %448 = vmatpush1.msra.mxu0 %v393
        %449 = vmatprep.subr.mxu0 0.0
        %450 = vmatpush1.msra.mxu0 %v394
        %451 = vmatprep.subr.mxu0 0.0
        %452 = vmatpush1.msra.mxu0 %v416
        %453 = vmatprep.subr.mxu0 0.0
        %454 = vmatpush1.msra.mxu0 %v417
        %455 = vmatprep.subr.mxu0 0.0
        %456 = vmatpush1.msra.mxu0 %v418
        %457 = vmatprep.subr.mxu0 0.0
        %458 = vmatpush1.msra.mxu0 %v419
        %459 = vmatprep.subr.mxu0 0.0
        %460 = vmatpush1.msra.mxu0 0.0
        %461 = vmatprep.subr.mxu0 0.0
        %462 = vmatpush1.msra.mxu0 0.0
        %463 = vmatprep.subr.mxu0 0.0
        %464 = vmatpush1.msra.mxu0 0.0
        %465 = vmatprep.subr.mxu0 0.0
        %466 = vmatpush1.msra.mxu0 0.0
        %467 = vmatprep.subr.mxu0 0.0
        %468 = vmatpush1.msra.mxu0 0.0
        %469 = vmatprep.subr.mxu0 0.0
        %470 = vmatpush1.msra.mxu0 0.0
        %471 = vmatprep.subr.mxu0 0.0
        %472 = vmatpush1.msra.mxu0 0.0
        %473 = vmatprep.subr.mxu0 0.0
        %474 = vmatpush1.msra.mxu0 0.0
        %475 = vmatprep.subr.mxu0 0.0
        %476 = vmatpush1.msra.mxu0 0.0
        %477 = vmatprep.subr.mxu0 0.0
        %478 = vmatpush1.msra.mxu0 0.0
        %479 = vmatprep.subr.mxu0 0.0
        %480 = vmatpush1.msra.mxu0 0.0
        %481 = vmatprep.subr.mxu0 0.0
        %482 = vmatpush1.msra.mxu0 0.0
        %483 = vmatprep.subr.mxu0 0.0
        %484 = vmatpush1.msra.mxu0 0.0
        %485 = vmatprep.subr.mxu0 0.0
        %486 = vmatpush1.msra.mxu0 0.0
        %487 = vmatprep.subr.mxu0 0.0
        %488 = vmatpush1.msra.mxu0 0.0
        %489 = vmatprep.subr.mxu0 0.0
        %490 = vmatpush1.msra.mxu0 0.0
        %491 = vmatprep.subr.mxu0 0.0
        %492 = vmatpush1.msra.mxu0 0.0
        %493 = vmatprep.subr.mxu0 0.0
        %494 = vmatpush1.msra.mxu0 0.0
        %495 = vmatprep.subr.mxu0 0.0
        %496 = vmatpush1.msra.mxu0 0.0
        %497 = vmatprep.subr.mxu0 0.0
        %498 = vmatpush1.msra.mxu0 0.0
        %499 = vmatprep.mubr.f32.mxu0 0.0
        %500 = vmatmul.mubr.f32.gmra.mrb[0].mxu0 %v433
        %v501 = vpop.f32.mrb[0].mxu0
        %v502 = vadd.f32 %v429, %v501
        %v503 = vpop.f32.mrb[0].mxu0
        %504 = vdwg.mxu0
        %v505 = vld [vmem:[%s3] sm:$0xff]
        %v506 = vld [vmem:[%s4] sm:$0xff]
        %507 = vadd.xlane.f32.xlu0 %v502
        %v508 = vpop.xlane.xlu0 %507
        %v509 = vrot.slane %v508, 4
        %v510 = vadd.f32 %v508, %v509
        %v511 = vrot.slane %v510, 2
        %v512 = vadd.f32 %v510, %v511
        %v513 = vrot.slane %v512, 1
        %v514 = vadd.f32 %v512, %v513
        %s515 = vtos %v514
        %v516 = vrcp.pop 1024.0
        %s517 = vtos %v516
        %s518 = smul.f32 %s515, %s517
        %v519 = vstv %s518
        %v520 = vsub.f32 %v502, %v519
        %v521 = vmul.f32 %v520, %v520
        %522 = vadd.xlane.f32.xlu0 %v521
        %v523 = vpop.xlane.xlu0 %522
        %v524 = vrot.slane %v523, 4
        %v525 = vadd.f32 %v523, %v524
        %v526 = vrot.slane %v525, 2
        %v527 = vadd.f32 %v525, %v526
        %v528 = vrot.slane %v527, 1
        %v529 = vadd.f32 %v527, %v528
        %s530 = vtos %v529
        %v531 = vrcp.pop 1024.0
        %s532 = vtos %v531
        %s533 = smul.f32 %s530, %s532
        %s534 = sadd.f32 %s533, 1e-05
        %v535 = vstv %s534
        %v536 = vrsqrt.pop %v535
        %s537 = vtos %v536
        %v538 = vstv %s537
        %v539 = vmul.f32 %v520, %v538
        %541 = vset.pattern.permute.xlu0 0
        %542 = vperm.xlu0 %541, %v505
        %v543 = vpop.permute.xlu0 %542
        %v545 = vmul.f32 %v539, %v543
        %547 = vset.pattern.permute.xlu0 0
        %548 = vperm.xlu0 %547, %v506
        %v549 = vpop.permute.xlu0 %548
        %v551 = vadd.f32 %v545, %v549
        %v552 = vmul.f32 %v551, 0.5
        %v553 = vmul.f32 %v551, 0.044715
        %v554 = vmul.f32 %v553, %v551
        %v555 = vmul.f32 %v554, %v551
        %v556 = vadd.f32 %v551, %v555
        %v557 = vmul.f32 %v556, 0.7978846
        %v558 = vtanh.pop %v557
        %v559 = vadd.f32 %v558, 1.0
        %v560 = vmul.f32 %v552, %v559
        %v561 = vld [vmem:[%s5] sm:$0xff]
        %v562 = vld [vmem:[%s5 + $0x8] sm:$0xff]
        %v563 = vld [vmem:[%s5 + $0x10] sm:$0xff]
        %v564 = vld [vmem:[%s5 + $0x18] sm:$0xff]
        %v565 = vld [vmem:[%s5 + $0x20] sm:$0xff]
        %v566 = vld [vmem:[%s5 + $0x28] sm:$0xff]
        %v567 = vld [vmem:[%s5 + $0x30] sm:$0xff]
        %v568 = vld [vmem:[%s5 + $0x38] sm:$0xff]
        %v569 = vld [vmem:[%s6] sm:$0xff]
        %v570 = vld [vmem:[%s6 + $0x8] sm:$0xff]
        %v571 = vld [vmem:[%s6 + $0x10] sm:$0xff]
        %v572 = vld [vmem:[%s6 + $0x18] sm:$0xff]
        %v573 = vld [vmem:[%s6 + $0x20] sm:$0xff]
        %v574 = vld [vmem:[%s6 + $0x28] sm:$0xff]
        %v575 = vld [vmem:[%s6 + $0x30] sm:$0xff]
        %v576 = vld [vmem:[%s6 + $0x38] sm:$0xff]
        %578 = vset.pattern.permute.xlu0 0
        %579 = vperm.xlu0 %578, %v569
        %v580 = vpop.permute.xlu0 %579
        %583 = vset.pattern.permute.xlu0 0
        %584 = vperm.xlu0 %583, %v570
        %v585 = vpop.permute.xlu0 %584
        %588 = vset.pattern.permute.xlu0 0
        %589 = vperm.xlu0 %588, %v571
        %v590 = vpop.permute.xlu0 %589
        %593 = vset.pattern.permute.xlu0 0
        %594 = vperm.xlu0 %593, %v572
        %v595 = vpop.permute.xlu0 %594
        %598 = vset.pattern.permute.xlu0 0
        %599 = vperm.xlu0 %598, %v573
        %v600 = vpop.permute.xlu0 %599
        %603 = vset.pattern.permute.xlu0 0
        %604 = vperm.xlu0 %603, %v574
        %v605 = vpop.permute.xlu0 %604
        %608 = vset.pattern.permute.xlu0 0
        %609 = vperm.xlu0 %608, %v575
        %v610 = vpop.permute.xlu0 %609
        %613 = vset.pattern.permute.xlu0 0
        %614 = vperm.xlu0 %613, %v576
        %v615 = vpop.permute.xlu0 %614
        %vm617 = vcmask 64512
        %v619 = vsel %vm617, %v561, 0
        %v622 = vsel %vm617, %v562, 0
        %v625 = vsel %vm617, %v563, 0
        %v628 = vsel %vm617, %v564, 0
        %v631 = vsel %vm617, %v565, 0
        %v634 = vsel %vm617, %v566, 0
        %v637 = vsel %vm617, %v567, 0
        %v640 = vsel %vm617, %v568, 0
        %642 = vmatprep.subr.mxu0 0.0
        %643 = vmatpush1.msra.mxu0 %v560
        %644 = vmatprep.subr.mxu0 0.0
        %645 = vmatpush1.msra.mxu0 0.0
        %646 = vmatprep.subr.mxu0 0.0
        %647 = vmatpush1.msra.mxu0 0.0
        %648 = vmatprep.subr.mxu0 0.0
        %649 = vmatpush1.msra.mxu0 0.0
        %650 = vmatprep.subr.mxu0 0.0
        %651 = vmatpush1.msra.mxu0 0.0
        %652 = vmatprep.subr.mxu0 0.0
        %653 = vmatpush1.msra.mxu0 0.0
        %654 = vmatprep.subr.mxu0 0.0
        %655 = vmatpush1.msra.mxu0 0.0
        %656 = vmatprep.subr.mxu0 0.0
        %657 = vmatpush1.msra.mxu0 0.0
        %658 = vmatprep.subr.mxu0 0.0
        %659 = vmatpush1.msra.mxu0 0.0
        %660 = vmatprep.subr.mxu0 0.0
        %661 = vmatpush1.msra.mxu0 0.0
        %662 = vmatprep.subr.mxu0 0.0
        %663 = vmatpush1.msra.mxu0 0.0
        %664 = vmatprep.subr.mxu0 0.0
        %665 = vmatpush1.msra.mxu0 0.0
        %666 = vmatprep.subr.mxu0 0.0
        %667 = vmatpush1.msra.mxu0 0.0
        %668 = vmatprep.subr.mxu0 0.0
        %669 = vmatpush1.msra.mxu0 0.0
        %670 = vmatprep.subr.mxu0 0.0
        %671 = vmatpush1.msra.mxu0 0.0
        %672 = vmatprep.subr.mxu0 0.0
        %673 = vmatpush1.msra.mxu0 0.0
        %674 = vmatprep.subr.mxu0 0.0
        %675 = vmatpush1.msra.mxu0 0.0
        %676 = vmatprep.subr.mxu0 0.0
        %677 = vmatpush1.msra.mxu0 0.0
        %678 = vmatprep.subr.mxu0 0.0
        %679 = vmatpush1.msra.mxu0 0.0
        %680 = vmatprep.subr.mxu0 0.0
        %681 = vmatpush1.msra.mxu0 0.0
        %682 = vmatprep.subr.mxu0 0.0
        %683 = vmatpush1.msra.mxu0 0.0
        %684 = vmatprep.subr.mxu0 0.0
        %685 = vmatpush1.msra.mxu0 0.0
        %686 = vmatprep.subr.mxu0 0.0
        %687 = vmatpush1.msra.mxu0 0.0
        %688 = vmatprep.subr.mxu0 0.0
        %689 = vmatpush1.msra.mxu0 0.0
        %690 = vmatprep.subr.mxu0 0.0
        %691 = vmatpush1.msra.mxu0 0.0
        %692 = vmatprep.subr.mxu0 0.0
        %693 = vmatpush1.msra.mxu0 0.0
        %694 = vmatprep.subr.mxu0 0.0
        %695 = vmatpush1.msra.mxu0 0.0
        %696 = vmatprep.subr.mxu0 0.0
        %697 = vmatpush1.msra.mxu0 0.0
        %698 = vmatprep.subr.mxu0 0.0
        %699 = vmatpush1.msra.mxu0 0.0
        %700 = vmatprep.subr.mxu0 0.0
        %701 = vmatpush1.msra.mxu0 0.0
        %702 = vmatprep.subr.mxu0 0.0
        %703 = vmatpush1.msra.mxu0 0.0
        %704 = vmatprep.subr.mxu0 0.0
        %705 = vmatpush1.msra.mxu0 0.0
        %706 = vmatprep.mubr.f32.mxu0 0.0
        %707 = vmatmul.mubr.f32.gmra.mrb[0].mxu0 %v619
        %v708 = vpop.f32.mrb[0].mxu0
        %v709 = vadd.f32 %v580, %v708
        %v710 = vpop.f32.mrb[0].mxu0
        %711 = vmatprep.mubr.f32.mxu0 0.0
        %712 = vmatmul.mubr.f32.gmra.mrb[0].mxu0 %v622
        %v713 = vpop.f32.mrb[0].mxu0
        %v714 = vadd.f32 %v585, %v713
        %v715 = vpop.f32.mrb[0].mxu0
        %716 = vmatprep.mubr.f32.mxu0 0.0
        %717 = vmatmul.mubr.f32.gmra.mrb[0].mxu0 %v625
        %v718 = vpop.f32.mrb[0].mxu0
        %v719 = vadd.f32 %v590, %v718
        %v720 = vpop.f32.mrb[0].mxu0
        %721 = vmatprep.mubr.f32.mxu0 0.0
        %722 = vmatmul.mubr.f32.gmra.mrb[0].mxu0 %v628
        %v723 = vpop.f32.mrb[0].mxu0
        %v724 = vadd.f32 %v595, %v723
        %v725 = vpop.f32.mrb[0].mxu0
        %726 = vmatprep.mubr.f32.mxu0 0.0
        %727 = vmatmul.mubr.f32.gmra.mrb[0].mxu0 %v631
        %v728 = vpop.f32.mrb[0].mxu0
        %v729 = vadd.f32 %v600, %v728
        %v730 = vpop.f32.mrb[0].mxu0
        %731 = vmatprep.mubr.f32.mxu0 0.0
        %732 = vmatmul.mubr.f32.gmra.mrb[0].mxu0 %v634
        %v733 = vpop.f32.mrb[0].mxu0
        %v734 = vadd.f32 %v605, %v733
        %v735 = vpop.f32.mrb[0].mxu0
        %736 = vmatprep.mubr.f32.mxu0 0.0
        %737 = vmatmul.mubr.f32.gmra.mrb[0].mxu0 %v637
        %v738 = vpop.f32.mrb[0].mxu0
        %v739 = vadd.f32 %v610, %v738
        %v740 = vpop.f32.mrb[0].mxu0
        %741 = vmatprep.mubr.f32.mxu0 0.0
        %742 = vmatmul.mubr.f32.gmra.mrb[0].mxu0 %v640
        %v743 = vpop.f32.mrb[0].mxu0
        %v744 = vadd.f32 %v615, %v743
        %v745 = vpop.f32.mrb[0].mxu0
        %746 = vdwg.mxu0
        %v747 = vld [vmem:[%s7] sm:$0xff]
        %v748 = vld [vmem:[%s7 + $0x8] sm:$0xff]
        %v749 = vld [vmem:[%s7 + $0x10] sm:$0xff]
        %v750 = vld [vmem:[%s7 + $0x18] sm:$0xff]
        %v751 = vld [vmem:[%s7 + $0x20] sm:$0xff]
        %v752 = vld [vmem:[%s7 + $0x28] sm:$0xff]
        %v753 = vld [vmem:[%s7 + $0x30] sm:$0xff]
        %v754 = vld [vmem:[%s7 + $0x38] sm:$0xff]
        %v755 = vld [vmem:[%s8] sm:$0xff]
        %v756 = vld [vmem:[%s8 + $0x8] sm:$0xff]
        %v757 = vld [vmem:[%s8 + $0x10] sm:$0xff]
        %v758 = vld [vmem:[%s8 + $0x18] sm:$0xff]
        %v759 = vld [vmem:[%s8 + $0x20] sm:$0xff]
        %v760 = vld [vmem:[%s8 + $0x28] sm:$0xff]
        %v761 = vld [vmem:[%s8 + $0x30] sm:$0xff]
        %v762 = vld [vmem:[%s8 + $0x38] sm:$0xff]
        %v763 = vadd.f32 %v709, %v714
        %v764 = vadd.f32 %v763, %v719
        %v765 = vadd.f32 %v764, %v724
        %v766 = vadd.f32 %v765, %v729
        %v767 = vadd.f32 %v766, %v734
        %v768 = vadd.f32 %v767, %v739
        %v769 = vadd.f32 %v768, %v744
        %770 = vadd.xlane.f32.xlu0 %v769
        %v771 = vpop.xlane.xlu0 %770
        %v772 = vrot.slane %v771, 4
        %v773 = vadd.f32 %v771, %v772
        %v774 = vrot.slane %v773, 2
        %v775 = vadd.f32 %v773, %v774
        %v776 = vrot.slane %v775, 1
        %v777 = vadd.f32 %v775, %v776
        %s778 = vtos %v777
        %v779 = vrcp.pop 8192.0
        %s780 = vtos %v779
        %s781 = smul.f32 %s778, %s780
        %v782 = vstv %s781
        %v783 = vsub.f32 %v709, %v782
        %v784 = vsub.f32 %v714, %v782
        %v785 = vsub.f32 %v719, %v782
        %v786 = vsub.f32 %v724, %v782
        %v787 = vsub.f32 %v729, %v782
        %v788 = vsub.f32 %v734, %v782
        %v789 = vsub.f32 %v739, %v782
        %v790 = vsub.f32 %v744, %v782
        %v791 = vmul.f32 %v783, %v783
        %v792 = vmul.f32 %v784, %v784
        %v793 = vmul.f32 %v785, %v785
        %v794 = vmul.f32 %v786, %v786
        %v795 = vmul.f32 %v787, %v787
        %v796 = vmul.f32 %v788, %v788
        %v797 = vmul.f32 %v789, %v789
        %v798 = vmul.f32 %v790, %v790
        %v799 = vadd.f32 %v791, %v792
        %v800 = vadd.f32 %v799, %v793
        %v801 = vadd.f32 %v800, %v794
        %v802 = vadd.f32 %v801, %v795
        %v803 = vadd.f32 %v802, %v796
        %v804 = vadd.f32 %v803, %v797
        %v805 = vadd.f32 %v804, %v798
        %806 = vadd.xlane.f32.xlu0 %v805
        %v807 = vpop.xlane.xlu0 %806
        %v808 = vrot.slane %v807, 4
        %v809 = vadd.f32 %v807, %v808
        %v810 = vrot.slane %v809, 2
        %v811 = vadd.f32 %v809, %v810
        %v812 = vrot.slane %v811, 1
        %v813 = vadd.f32 %v811, %v812
        %s814 = vtos %v813
        %v815 = vrcp.pop 8192.0
        %s816 = vtos %v815
        %s817 = smul.f32 %s814, %s816
        %s818 = sadd.f32 %s817, 1e-05
        %v819 = vstv %s818
        %v820 = vrsqrt.pop %v819
        %s821 = vtos %v820
        %v822 = vstv %s821
        %v823 = vmul.f32 %v783, %v822
        %v824 = vmul.f32 %v784, %v822
        %v825 = vmul.f32 %v785, %v822
        %v826 = vmul.f32 %v786, %v822
        %v827 = vmul.f32 %v787, %v822
        %v828 = vmul.f32 %v788, %v822
        %v829 = vmul.f32 %v789, %v822
        %v830 = vmul.f32 %v790, %v822
        %832 = vset.pattern.permute.xlu0 0
        %833 = vperm.xlu0 %832, %v747
        %v834 = vpop.permute.xlu0 %833
        %837 = vset.pattern.permute.xlu0 0
        %838 = vperm.xlu0 %837, %v748
        %v839 = vpop.permute.xlu0 %838
        %842 = vset.pattern.permute.xlu0 0
        %843 = vperm.xlu0 %842, %v749
        %v844 = vpop.permute.xlu0 %843
        %847 = vset.pattern.permute.xlu0 0
        %848 = vperm.xlu0 %847, %v750
        %v849 = vpop.permute.xlu0 %848
        %852 = vset.pattern.permute.xlu0 0
        %853 = vperm.xlu0 %852, %v751
        %v854 = vpop.permute.xlu0 %853
        %857 = vset.pattern.permute.xlu0 0
        %858 = vperm.xlu0 %857, %v752
        %v859 = vpop.permute.xlu0 %858
        %862 = vset.pattern.permute.xlu0 0
        %863 = vperm.xlu0 %862, %v753
        %v864 = vpop.permute.xlu0 %863
        %867 = vset.pattern.permute.xlu0 0
        %868 = vperm.xlu0 %867, %v754
        %v869 = vpop.permute.xlu0 %868
        %v871 = vmul.f32 %v823, %v834
        %v872 = vmul.f32 %v824, %v839
        %v873 = vmul.f32 %v825, %v844
        %v874 = vmul.f32 %v826, %v849
        %v875 = vmul.f32 %v827, %v854
        %v876 = vmul.f32 %v828, %v859
        %v877 = vmul.f32 %v829, %v864
        %v878 = vmul.f32 %v830, %v869
        %880 = vset.pattern.permute.xlu0 0
        %881 = vperm.xlu0 %880, %v755
        %v882 = vpop.permute.xlu0 %881
        %885 = vset.pattern.permute.xlu0 0
        %886 = vperm.xlu0 %885, %v756
        %v887 = vpop.permute.xlu0 %886
        %890 = vset.pattern.permute.xlu0 0
        %891 = vperm.xlu0 %890, %v757
        %v892 = vpop.permute.xlu0 %891
        %895 = vset.pattern.permute.xlu0 0
        %896 = vperm.xlu0 %895, %v758
        %v897 = vpop.permute.xlu0 %896
        %900 = vset.pattern.permute.xlu0 0
        %901 = vperm.xlu0 %900, %v759
        %v902 = vpop.permute.xlu0 %901
        %905 = vset.pattern.permute.xlu0 0
        %906 = vperm.xlu0 %905, %v760
        %v907 = vpop.permute.xlu0 %906
        %910 = vset.pattern.permute.xlu0 0
        %911 = vperm.xlu0 %910, %v761
        %v912 = vpop.permute.xlu0 %911
        %915 = vset.pattern.permute.xlu0 0
        %916 = vperm.xlu0 %915, %v762
        %v917 = vpop.permute.xlu0 %916
        %v919 = vadd.f32 %v871, %v882
        %v920 = vadd.f32 %v872, %v887
        %v921 = vadd.f32 %v873, %v892
        %v922 = vadd.f32 %v874, %v897
        %v923 = vadd.f32 %v875, %v902
        %v924 = vadd.f32 %v876, %v907
        %v925 = vadd.f32 %v877, %v912
        %v926 = vadd.f32 %v878, %v917
        %v927 = vsub.f32 0.0, %v923
        %v928 = vsub.f32 0.0, %v924
        %v929 = vsub.f32 0.0, %v925
        %v930 = vsub.f32 0.0, %v926
        %v931 = vmul.f32 %v927, 1.442695
        %v932 = vpow.pop %v931
        %v933 = vmul.f32 %v928, 1.442695
        %v934 = vpow.pop %v933
        %v935 = vmul.f32 %v929, 1.442695
        %v936 = vpow.pop %v935
        %v937 = vmul.f32 %v930, 1.442695
        %v938 = vpow.pop %v937
        %v939 = vadd.f32 %v932, 1.0
        %v940 = vadd.f32 %v934, 1.0
        %v941 = vadd.f32 %v936, 1.0
        %v942 = vadd.f32 %v938, 1.0
        %v943 = vrcp.pop %v939
        %v944 = vmul.f32 1.0, %v943
        %v945 = vrcp.pop %v940
        %v946 = vmul.f32 1.0, %v945
        %v947 = vrcp.pop %v941
        %v948 = vmul.f32 1.0, %v947
        %v949 = vrcp.pop %v942
        %v950 = vmul.f32 1.0, %v949
        %v951 = vmul.f32 %v919, %v944
        %v952 = vmul.f32 %v920, %v946
        %v953 = vmul.f32 %v921, %v948
        %v954 = vmul.f32 %v922, %v950
        %v955 = vld [vmem:[%s9] sm:$0xff]
        %v956 = vld [vmem:[%s9 + $0x8] sm:$0xff]
        %v957 = vld [vmem:[%s9 + $0x10] sm:$0xff]
        %v958 = vld [vmem:[%s9 + $0x18] sm:$0xff]
        %960 = vset.pattern.permute.xlu0 0
        %961 = vperm.xlu0 %960, %v955
        %v962 = vpop.permute.xlu0 %961
        %965 = vset.pattern.permute.xlu0 0
        %966 = vperm.xlu0 %965, %v956
        %v967 = vpop.permute.xlu0 %966
        %970 = vset.pattern.permute.xlu0 0
        %971 = vperm.xlu0 %970, %v957
        %v972 = vpop.permute.xlu0 %971
        %975 = vset.pattern.permute.xlu0 0
        %976 = vperm.xlu0 %975, %v958
        %v977 = vpop.permute.xlu0 %976
        %v979 = vmul.f32 %v962, %v951
        %v980 = vmul.f32 %v967, %v952
        %v981 = vmul.f32 %v972, %v953
        %v982 = vmul.f32 %v977, %v954
        %987 = vrot.lane.b32.xlu0 %v979, 2
        %v988 = vpop.permute.xlu0 %987
        %989 = vrot.lane.b32.xlu0 %v980, 2
        %v990 = vpop.permute.xlu0 %989
        %991 = vrot.lane.b32.xlu0 %v981, 2
        %v992 = vpop.permute.xlu0 %991
        %993 = vrot.lane.b32.xlu0 %v982, 2
        %v994 = vpop.permute.xlu0 %993
        %v999 = vadd.f32 %v358, %v988
        %v1000 = vadd.f32 %v362, %v988
        %v1001 = vadd.f32 %v359, %v990
        %v1002 = vadd.f32 %v363, %v990
        %v1003 = vadd.f32 %v360, %v992
        %v1004 = vadd.f32 %v364, %v992
        %v1005 = vadd.f32 %v361, %v994
        %v1006 = vadd.f32 %v365, %v994
        %1015 = vrot.lane.b32.xlu0 %v999, 126
        %v1016 = vpop.permute.xlu0 %1015
        %1017 = vrot.lane.b32.xlu0 %v1000, 126
        %v1018 = vpop.permute.xlu0 %1017
        %1019 = vrot.lane.b32.xlu0 %v1001, 126
        %v1020 = vpop.permute.xlu0 %1019
        %1021 = vrot.lane.b32.xlu0 %v1002, 126
        %v1022 = vpop.permute.xlu0 %1021
        %1023 = vrot.lane.b32.xlu0 %v1003, 126
        %v1024 = vpop.permute.xlu0 %1023
        %1025 = vrot.lane.b32.xlu0 %v1004, 126
        %v1026 = vpop.permute.xlu0 %1025
        %1027 = vrot.lane.b32.xlu0 %v1005, 126
        %v1028 = vpop.permute.xlu0 %1027
        %1029 = vrot.lane.b32.xlu0 %v1006, 126
        %v1030 = vpop.permute.xlu0 %1029
        %v1031 = vsel %vm390, %v1016, %v1018
        %v1032 = vsel %vm390, %v1020, %v1022
        %v1033 = vsel %vm390, %v1024, %v1026
        %v1034 = vsel %vm390, %v1028, %v1030
        %1039 = vst [vmem:[%s352] sm:$0xff] %v1031
        %1040 = vst [vmem:[%s352 + $0x8] sm:$0xff] %v1032
        %1041 = vst [vmem:[%s352 + $0x10] sm:$0xff] %v1033
        %1042 = vst [vmem:[%s352 + $0x18] sm:$0xff] %v1034
        %s1043 = sand.u32 %s247, 1
        %s1044 = scalar_lea.sflag [#allocation3], %s1043
        %s1045 = sand.u32 %s247, 1
        %s1046 = smul.addr %s1045, 32
        %s1047 = scalar_lea.vmem [#allocation2], %s1046
        // Predicated region
        $region61: #{dconv_forward.3} parent=59 // pred_check
          %p1048 = pneg %p257
        $region62: #{dconv_forward.3} parent=59 // pred_check_branch
          %1050 = sbr.rel (%p1048) target = $region64
        $region63: #{dconv_forward.3} parent=59 // pred_region
          %s1052 = ssub.s32 512, 512
          %1053 = vsyncadd %s1044, %s1052
          %s1054 = smul.addr %s24, 4
          %s1055 = smul.addr %s1054, 128
          %s1056 = scalar_lea.hbm %s10, %s1055
          %s1057 = sshll.u32 %s1047, 4
          %s1058 = int_to_ptr.vmem [resolvable:$true] %s1057
          %1063 = dma.vmem_to_hbm [thread:$0]  %s1058, 512, %s1056, %s1044, 128, 128, 8
        $region64: #{dconv_forward.3} parent=59 // pred_fallthru
          _
      $region60: #{dconv_forward.3} parent=5 // pred_fallthru
        _
      %p1064 = scmp.le.s32.totalorder 2, %s19
      // Predicated region
      $region65: #{dconv_forward.3} parent=5 // pred_check
        %p1065 = pneg %p1064
      $region66: #{dconv_forward.3} parent=5 // pred_check_branch
        %1067 = sbr.rel (%p1065) target = $region68
      $region67: #{dconv_forward.3} parent=5 // pred_region
        %s1068 = ssub.s32 %s19, 2
        // Predicated region
        $region69: #{dconv_forward.3} parent=67 // pred_check
          %p1069 = pneg %p263
        $region70: #{dconv_forward.3} parent=67 // pred_check_branch
          %1071 = sbr.rel (%p1069) target = $region72
        $region71: #{dconv_forward.3} parent=67 // pred_region
          %s1072 = sand.u32 %s248, 1
          %s1073 = scalar_lea.sflag [#allocation3], %s1072
          %s1074 = sand.u32 %s248, 1
          %s1075 = smul.addr %s1074, 32
          %s1076 = scalar_lea.vmem [#allocation2], %s1075
          %1077 = dma.done %s1073, 512
        $region72: #{dconv_forward.3} parent=67 // pred_fallthru
          _
      $region68: #{dconv_forward.3} parent=5 // pred_fallthru
        _
    $region6: #{dconv_forward.3} parent=1 // loop_footer
      %s23 = sadd.s32 1, %s19
    $region7: #{dconv_forward.3} parent=1 // loop_footer_branch
      %18 = sbr.rel target = $region3
    $region8: #{dconv_forward.3} parent=1 // loop_exit
      _
    %1078 = vsyncpa [#allocation3], 1
    %s1079 = scalar_lea.sflag [#allocation3], 1
    %1080 = vsyncpa %s1079, 1

</llo_original>
